<compile_context>
chip_gen: v7x
topology: tpu7x:2x2x1
jax: 0.10.0
libtpu: 0.0.40
codegen_flags: <defaults>
</compile_context>

<pallas_src>
import functools

import jax
import jax.numpy as jnp
from jax.experimental import pallas as pl
from jax.experimental.pallas import tpu as pltpu

_BN_EPS = 1e-5


# ----------------------------------------------------------------------------
# Fused Pallas kernel: one grid step per block of `b_blk` images.
# ----------------------------------------------------------------------------
def _linear_attention2_kernel(x_ref, qkw_ref, qkb_ref, pew_ref, peb_ref,
                              mask_ref, o_ref, *, num_heads, W, mxu_dtype):
    b_blk, C, n = x_ref.shape
    h = num_heads
    d = C // h
    c2 = C // 2
    inv_n = 1.0 / float(n)          # equals both 1/n (mean) and s*s (s=n**-0.5)

    def mx(a):                       # optional bf16 cast for MXU operands
        return a if mxu_dtype is None else a.astype(mxu_dtype)

    w_q = mx(qkw_ref[0])             # (C, C/2)  BN scale pre-folded on host
    w_k = mx(qkw_ref[1])
    b_q = qkb_ref[0]                 # (C, 1)
    b_k = qkb_ref[1]

    for bi in range(b_blk):          # static unroll over images in the block
        x = x_ref[bi]                # (C, n)

        # --- qk: grouped (groups=2) 1x1 conv + folded BN + (elu + 1) ---------
        zq = jnp.dot(w_q, mx(x[:c2]), preferred_element_type=jnp.float32) + b_q
        zk = jnp.dot(w_k, mx(x[c2:]), preferred_element_type=jnp.float32) + b_k
        q = jnp.where(zq > 0, zq + 1.0, jnp.exp(zq))      # elu(x) + 1
        k = jnp.where(zk > 0, zk + 1.0, jnp.exp(zk))

        qh = q.reshape(h, d, n)
        kh = k.reshape(h, d, n)
        vh = x.reshape(h, d, n)

        # --- re-associated linear attention (no (h, n, n) intermediate) ------
        #   a[i, j]   = q[:, i] . k[:, j]
        #   out[:, i] = (s^2 / (mean_j a[i, j] + 1e-6)) * sum_j a[i, j] v[:, j]
        #             = (s^2 / denom[i]) * (KV @ q)[:, i],   KV = v @ k^T
        kv = jnp.einsum("hdn,hen->hde", mx(vh), mx(kh),
                        preferred_element_type=jnp.float32)       # (h, d, d)
        num = jnp.einsum("hde,hei->hdi", mx(kv), mx(qh),
                         preferred_element_type=jnp.float32)      # (h, d, n)
        ksum = jnp.sum(kh, axis=-1, keepdims=True)                # (h, d, 1)
        den = jnp.sum(qh * ksum, axis=1, keepdims=True) * inv_n + 1e-6  # (h,1,n)
        # Tiny (h*n element) exact reciprocal with s*s folded in; the O(n^2)
        # divide of the original formulation is gone entirely.
        attn = (num * (inv_n / den)).reshape(C, n)

        # --- pe: 3x3 depthwise conv + folded BN via XLU lane rotations --------
        acc = x * pew_ref[4] + peb_ref[...]          # centre tap + BN bias
        for t in range(9):
            if t == 4:
                continue
            dy, dx = t // 3 - 1, t % 3 - 1
            off = dy * W + dx
            # sh[:, i] = x[:, (i + off) mod n]; wrap-around and out-of-image
            # neighbours are zeroed by the precomputed per-tap mask.
            sh = pltpu.roll(x, (-off) % n, axis=1)
            acc = acc + (sh * mask_ref[t]) * pew_ref[t]

        o_ref[bi] = (attn + acc).astype(o_ref.dtype)


# ----------------------------------------------------------------------------
# Host wrapper
# ----------------------------------------------------------------------------
def _fold_bn(gamma, beta, running_mean, running_var, eps=_BN_EPS):
    scale = gamma / jnp.sqrt(running_var + eps)
    bias = beta - running_mean * scale
    return scale, bias


def _pick_b_blk(B, C, n, vmem_budget_bytes=8 << 20):
    """Images per grid step: as large as the VMEM budget allows while keeping
    the grid >= 2 steps so both v7x TensorCores get work."""
    per_image = 10 * C * n * 4            # in/out double-buffered + temporaries
    cap = max(1, vmem_budget_bytes // per_image)
    best = 1
    for cand in range(1, B + 1):
        if B % cand == 0 and cand <= cap and (B // cand >= 2 or B == 1):
            best = cand
    return best


def linear_attention2(x_nchw, params, *, b_blk=None, mxu_dtype=None):
    """LinearAttention2 forward (eval-mode BN).  x_nchw: (B,C,H,W) -> (B,C,H,W)."""
    B, C, H, W = x_nchw.shape
    n = H * W
    num_heads = params["num_heads"]
    assert C % num_heads == 0 and C % 2 == 0

    # Fold eval-mode BatchNorm into conv weights / bias on the host.
    qk_scale, qk_bias = _fold_bn(*params["qk_bn"])            # (2C,)
    pe_scale, pe_bias = _fold_bn(*params["pe_bn"])            # (C,)

    # Grouped 1x1 conv weight with the BN scale folded into output channels.
    qkw = (params["qk_w"][:, :, 0, 0].reshape(2, C, C // 2)
           * qk_scale.reshape(2, C, 1))
    qkb = qk_bias.reshape(2, C, 1)
    # Depthwise 3x3 taps (t = ky*3 + kx) with the BN scale folded in.
    pew = (params["pe_w"][:, 0].reshape(C, 9) * pe_scale[:, None]).T
    pew = pew.reshape(9, C, 1)
    peb = pe_bias.reshape(C, 1)

    # Combined per-tap validity mask (row + column edges) for the roll-based
    # depthwise conv: mask[t, 0, i] == 1 iff pixel i has an in-image neighbour
    # at offset (dy, dx) = (t//3 - 1, t%3 - 1).
    row = jnp.arange(n, dtype=jnp.int32) // W
    col = jnp.arange(n, dtype=jnp.int32) % W
    masks = []
    for t in range(9):
        dy, dx = t // 3 - 1, t % 3 - 1
        ok = ((row + dy >= 0) & (row + dy < H) &
              (col + dx >= 0) & (col + dx < W))
        masks.append(ok)
    tapmask = jnp.stack(masks).astype(jnp.float32).reshape(9, 1, n)

    if b_blk is None:
        b_blk = _pick_b_blk(B, C, n)
    assert B % b_blk == 0

    x = x_nchw.reshape(B, C, n)          # NCHW-native view; no dtype copy

    out = pl.pallas_call(
        functools.partial(_linear_attention2_kernel, num_heads=num_heads,
                          W=W, mxu_dtype=mxu_dtype),
        out_shape=jax.ShapeDtypeStruct((B, C, n), x.dtype),
        grid=(B // b_blk,),
        in_specs=[
            pl.BlockSpec((b_blk, C, n), lambda i: (i, 0, 0)),
            pl.BlockSpec((2, C, C // 2), lambda i: (0, 0, 0)),
            pl.BlockSpec((2, C, 1), lambda i: (0, 0, 0)),
            pl.BlockSpec((9, C, 1), lambda i: (0, 0, 0)),
            pl.BlockSpec((C, 1), lambda i: (0, 0)),
            pl.BlockSpec((9, 1, n), lambda i: (0, 0, 0)),
        ],
        out_specs=pl.BlockSpec((b_blk, C, n), lambda i: (i, 0, 0)),
        compiler_params=pltpu.CompilerParams(
            dimension_semantics=("parallel",),      # both TCs on v7x
            vmem_limit_bytes=32 * 1024 * 1024),
    )(x, qkw, qkb, pew, peb, tapmask)
    return out.reshape(B, C, H, W)


# ----------------------------------------------------------------------------
# Pure-JAX reference (mirrors the PyTorch forward, eval-mode BN)
# ----------------------------------------------------------------------------
def linear_attention2_reference(x, params):
    B, C, H, W = x.shape
    n = H * W
    num_heads = params["num_heads"]
    hd = C // num_heads
    s = float(n) ** -0.5
    hp = jax.lax.Precision.HIGHEST

    qk_scale, qk_bias = _fold_bn(*params["qk_bn"])
    pe_scale, pe_bias = _fold_bn(*params["pe_bn"])

    xf = x.reshape(B, C, n)
    xg = xf.reshape(B, 2, C // 2, n)
    wg = params["qk_w"][:, :, 0, 0].reshape(2, C, C // 2)
    qk = jnp.einsum("goc,bgcn->bgon", wg, xg, precision=hp)   # grouped conv
    qk = qk * qk_scale.reshape(1, 2, C, 1) + qk_bias.reshape(1, 2, C, 1)
    qk = jnp.where(qk > 0, qk + 1.0, jnp.exp(qk))             # elu + 1

    q = qk[:, 0].reshape(B, num_heads, hd, n)
    k = qk[:, 1].reshape(B, num_heads, hd, n)
    v = xf.reshape(B, num_heads, hd, n)

    a = jnp.einsum("bhdi,bhdj->bhij", q, k, precision=hp)
    a = a / (a.mean(axis=-1, keepdims=True) + 1e-6)
    out = jnp.einsum("bhij,bhdj->bhdi", a * s, v * s, precision=hp)
    out = out.reshape(B, C, H, W)

    # pe: depthwise 3x3 conv (padding=1) + BN, as explicit shifted taps.
    xp = jnp.pad(x, ((0, 0), (0, 0), (1, 1), (1, 1)))
    pe = jnp.zeros_like(x)
    w = params["pe_w"]                                        # (C, 1, 3, 3)
    for ky in range(3):
        for kx in range(3):
            pe = pe + w[:, 0, ky, kx].reshape(1, C, 1, 1) * \
                xp[:, :, ky:ky + H, kx:kx + W]
    pe = pe * pe_scale.reshape(1, C, 1, 1) + pe_bias.reshape(1, C, 1, 1)
    return out + pe


# ----------------------------------------------------------------------------
# Deterministic parameter construction (mirrors module __init__ shapes)
# ----------------------------------------------------------------------------
def init_params(key, dim=64, num_heads=2):
    k1, k2 = jax.random.split(key)

    def fresh_bn(c):
        # nn.init.constant_(norm.weight, 1), bias=0, fresh running stats.
        return (jnp.ones((c,), jnp.float32), jnp.zeros((c,), jnp.float32),
                jnp.zeros((c,), jnp.float32), jnp.ones((c,), jnp.float32))

    return dict(
        num_heads=num_heads,
        qk_w=jax.random.normal(k1, (2 * dim, dim // 2, 1, 1), jnp.float32) * 0.05,
        qk_bn=fresh_bn(2 * dim),
        pe_w=jax.random.normal(k2, (dim, 1, 3, 3), jnp.float32) * 0.1,
        pe_bn=fresh_bn(dim),
    )


# ----------------------------------------------------------------------------
if __name__ == "__main__":
    key = jax.random.PRNGKey(0)
    k_params, k_x = jax.random.split(key)

    B, DIM, H, W = 2, 64, 16, 16
    NUM_HEADS = 2
    params = init_params(k_params, dim=DIM, num_heads=NUM_HEADS)
    x = jax.random.normal(k_x, (B, DIM, H, W), jnp.float32)

    fwd = jax.jit(functools.partial(linear_attention2, params=params))
    out = fwd(x)
    jax.block_until_ready(out)

    ref = linear_attention2_reference(x, params)
    assert out.shape == (B, DIM, H, W), out.shape
    assert bool(jnp.all(jnp.isfinite(out)))
    assert bool(jnp.allclose(out, ref, rtol=1e-3, atol=1e-4)), \
        float(jnp.max(jnp.abs(out - ref)))
    print("KERNEL_OK")
</pallas_src>

<mosaic_0001>
module attributes {stable_mosaic.version = 11 : i64} {
  func.func @_linear_attention2_kernel(%arg0: i32, %arg1: memref<1x64x256xf32, #tpu.memory_space<vmem>>, %arg2: memref<2x64x32xf32, #tpu.memory_space<vmem>>, %arg3: memref<2x64x1xf32, #tpu.memory_space<vmem>>, %arg4: memref<9x64x1xf32, #tpu.memory_space<vmem>>, %arg5: memref<64x1xf32, #tpu.memory_space<vmem>>, %arg6: memref<9x1x256xf32, #tpu.memory_space<vmem>>, %arg7: memref<1x64x256xf32, #tpu.memory_space<vmem>>) attributes {dimension_semantics = [#tpu.dimension_semantics<parallel>], iteration_bounds = array<i64: 2>, scalar_prefetch = 0 : i64, scratch_operands = 0 : i64, tpu.core_type = #tpu.core_type<tc>, window_params = [{transform_indices = @transform_0, window_bounds = array<i64: 1, 64, 256>}, {pipeline_mode = #tpu.pipeline_mode<synchronous>, transform_indices = @transform_1, window_bounds = array<i64: 2, 64, 32>}, {pipeline_mode = #tpu.pipeline_mode<synchronous>, transform_indices = @transform_2, window_bounds = array<i64: 2, 64, 1>}, {pipeline_mode = #tpu.pipeline_mode<synchronous>, transform_indices = @transform_3, window_bounds = array<i64: 9, 64, 1>}, {pipeline_mode = #tpu.pipeline_mode<synchronous>, transform_indices = @transform_4, window_bounds = array<i64: 64, 1>}, {pipeline_mode = #tpu.pipeline_mode<synchronous>, transform_indices = @transform_5, window_bounds = array<i64: 9, 1, 256>}, {transform_indices = @transform_6, window_bounds = array<i64: 1, 64, 256>}]} {
    %c0 = arith.constant 0 : index
    %c0_0 = arith.constant 0 : index
    %c0_1 = arith.constant 0 : index
    %0 = vector.load %arg2[%c0, %c0_0, %c0_1] : memref<2x64x32xf32, #tpu.memory_space<vmem>>, vector<1x64x32xf32>
    %1 = vector.shape_cast %0 : vector<1x64x32xf32> to vector<64x32xf32>
    %c1 = arith.constant 1 : index
    %c0_2 = arith.constant 0 : index
    %c0_3 = arith.constant 0 : index
    %2 = vector.load %arg2[%c1, %c0_2, %c0_3] : memref<2x64x32xf32, #tpu.memory_space<vmem>>, vector<1x64x32xf32>
    %3 = vector.shape_cast %2 : vector<1x64x32xf32> to vector<64x32xf32>
    %c0_4 = arith.constant 0 : index
    %c0_5 = arith.constant 0 : index
    %c0_6 = arith.constant 0 : index
    %4 = vector.load %arg3[%c0_4, %c0_5, %c0_6] : memref<2x64x1xf32, #tpu.memory_space<vmem>>, vector<1x64x1xf32>
    %5 = vector.shape_cast %4 : vector<1x64x1xf32> to vector<64x1xf32>
    %c1_7 = arith.constant 1 : index
    %c0_8 = arith.constant 0 : index
    %c0_9 = arith.constant 0 : index
    %6 = vector.load %arg3[%c1_7, %c0_8, %c0_9] : memref<2x64x1xf32, #tpu.memory_space<vmem>>, vector<1x64x1xf32>
    %7 = vector.shape_cast %6 : vector<1x64x1xf32> to vector<64x1xf32>
    %c0_10 = arith.constant 0 : index
    %c0_11 = arith.constant 0 : index
    %c0_12 = arith.constant 0 : index
    %8 = vector.load %arg1[%c0_10, %c0_11, %c0_12] : memref<1x64x256xf32, #tpu.memory_space<vmem>>, vector<1x64x256xf32>
    %9 = vector.shape_cast %8 : vector<1x64x256xf32> to vector<64x256xf32>
    %10 = vector.extract_strided_slice %9 {offsets = [0, 0], sizes = [32, 256], strides = [1, 1]} : vector<64x256xf32> to vector<32x256xf32>
    %cst = arith.constant dense<0.000000e+00> : vector<64x256xf32>
    %11 = tpu.matmul %1, %10, %cst {dimension_numbers = #tpu.dot_dimension_numbers<[1], [0], [0], [1], [0, 0, 1, 1], [], []>} : vector<64x32xf32>, vector<32x256xf32>, vector<64x256xf32> -> vector<64x256xf32>
    %12 = vector.broadcast %5 : vector<64x1xf32> to vector<64x256xf32>
    %13 = arith.addf %11, %12 : vector<64x256xf32>
    %14 = vector.extract_strided_slice %9 {offsets = [32, 0], sizes = [32, 256], strides = [1, 1]} : vector<64x256xf32> to vector<32x256xf32>
    %cst_13 = arith.constant dense<0.000000e+00> : vector<64x256xf32>
    %15 = tpu.matmul %3, %14, %cst_13 {dimension_numbers = #tpu.dot_dimension_numbers<[1], [0], [0], [1], [0, 0, 1, 1], [], []>} : vector<64x32xf32>, vector<32x256xf32>, vector<64x256xf32> -> vector<64x256xf32>
    %16 = vector.broadcast %7 : vector<64x1xf32> to vector<64x256xf32>
    %17 = arith.addf %15, %16 : vector<64x256xf32>
    %cst_14 = arith.constant 0.000000e+00 : f32
    %18 = vector.broadcast %cst_14 : f32 to vector<64x256xf32>
    %19 = arith.cmpf ogt, %13, %18 : vector<64x256xf32>
    %cst_15 = arith.constant 1.000000e+00 : f32
    %20 = vector.broadcast %cst_15 : f32 to vector<64x256xf32>
    %21 = arith.addf %13, %20 : vector<64x256xf32>
    %22 = math.exp %13 : vector<64x256xf32>
    %23 = arith.select %19, %21, %22 : vector<64x256xi1>, vector<64x256xf32>
    %cst_16 = arith.constant 0.000000e+00 : f32
    %24 = vector.broadcast %cst_16 : f32 to vector<64x256xf32>
    %25 = arith.cmpf ogt, %17, %24 : vector<64x256xf32>
    %cst_17 = arith.constant 1.000000e+00 : f32
    %26 = vector.broadcast %cst_17 : f32 to vector<64x256xf32>
    %27 = arith.addf %17, %26 : vector<64x256xf32>
    %28 = math.exp %17 : vector<64x256xf32>
    %29 = arith.select %25, %27, %28 : vector<64x256xi1>, vector<64x256xf32>
    %30 = vector.shape_cast %23 : vector<64x256xf32> to vector<2x32x256xf32>
    %31 = vector.shape_cast %29 : vector<64x256xf32> to vector<2x32x256xf32>
    %32 = vector.shape_cast %9 : vector<64x256xf32> to vector<2x32x256xf32>
    "tpu.trace_start"() <{level = 10 : i32, message = "hdn,hen->hde"}> : () -> ()
    %cst_18 = arith.constant dense<0.000000e+00> : vector<2x32x32xf32>
    %33 = tpu.matmul %32, %31, %cst_18 {dimension_numbers = #tpu.dot_dimension_numbers<[2], [2], [1], [1], [0, 0, 0, 1, 1, 1], [0], [0]>} : vector<2x32x256xf32>, vector<2x32x256xf32>, vector<2x32x32xf32> -> vector<2x32x32xf32>
    "tpu.trace_stop"() : () -> ()
    "tpu.trace_start"() <{level = 10 : i32, message = "hde,hei->hdi"}> : () -> ()
    %cst_19 = arith.constant dense<0.000000e+00> : vector<2x32x256xf32>
    %34 = tpu.matmul %33, %30, %cst_19 {dimension_numbers = #tpu.dot_dimension_numbers<[2], [1], [1], [2], [0, 0, 0, 1, 1, 2], [0], [0]>} : vector<2x32x32xf32>, vector<2x32x256xf32>, vector<2x32x256xf32> -> vector<2x32x256xf32>
    "tpu.trace_stop"() : () -> ()
    %cst_20 = arith.constant dense<0.000000e+00> : vector<2x32xf32>
    %35 = vector.multi_reduction <add>, %31, %cst_20 [2] : vector<2x32x256xf32> to vector<2x32xf32>
    %36 = vector.shape_cast %35 : vector<2x32xf32> to vector<2x32x1xf32>
    %37 = vector.broadcast %36 : vector<2x32x1xf32> to vector<2x32x256xf32>
    %38 = arith.mulf %30, %37 : vector<2x32x256xf32>
    %cst_21 = arith.constant dense<0.000000e+00> : vector<2x256xf32>
    %39 = vector.multi_reduction <add>, %38, %cst_21 [1] : vector<2x32x256xf32> to vector<2x256xf32>
    %40 = vector.shape_cast %39 : vector<2x256xf32> to vector<2x1x256xf32>
    %cst_22 = arith.constant 3.906250e-03 : f32
    %41 = vector.broadcast %cst_22 : f32 to vector<2x1x256xf32>
    %42 = arith.mulf %40, %41 : vector<2x1x256xf32>
    %cst_23 = arith.constant 9.99999997E-7 : f32
    %43 = vector.broadcast %cst_23 : f32 to vector<2x1x256xf32>
    %44 = arith.addf %42, %43 : vector<2x1x256xf32>
    %cst_24 = arith.constant 3.906250e-03 : f32
    %45 = vector.broadcast %cst_24 : f32 to vector<2x1x256xf32>
    %46 = arith.divf %45, %44 : vector<2x1x256xf32>
    %47 = vector.broadcast %46 : vector<2x1x256xf32> to vector<2x32x256xf32>
    %48 = arith.mulf %34, %47 : vector<2x32x256xf32>
    %49 = vector.shape_cast %48 : vector<2x32x256xf32> to vector<64x256xf32>
    %c4 = arith.constant 4 : index
    %c0_25 = arith.constant 0 : index
    %c0_26 = arith.constant 0 : index
    %50 = vector.load %arg4[%c4, %c0_25, %c0_26] : memref<9x64x1xf32, #tpu.memory_space<vmem>>, vector<1x64x1xf32>
    %51 = vector.shape_cast %50 : vector<1x64x1xf32> to vector<64x1xf32>
    %52 = vector.broadcast %51 : vector<64x1xf32> to vector<64x256xf32>
    %53 = arith.mulf %9, %52 : vector<64x256xf32>
    %c0_27 = arith.constant 0 : index
    %c0_28 = arith.constant 0 : index
    %54 = vector.load %arg5[%c0_27, %c0_28] : memref<64x1xf32, #tpu.memory_space<vmem>>, vector<64x1xf32>
    %55 = vector.broadcast %54 : vector<64x1xf32> to vector<64x256xf32>
    %56 = arith.addf %53, %55 : vector<64x256xf32>
    %c17_i32 = arith.constant 17 : i32
    %57 = tpu.dynamic_rotate %9 by %c17_i32 dim 1 : vector<64x256xf32>, i32 -> vector<64x256xf32>
    %c0_29 = arith.constant 0 : index
    %c0_30 = arith.constant 0 : index
    %c0_31 = arith.constant 0 : index
    %58 = vector.load %arg6[%c0_29, %c0_30, %c0_31] : memref<9x1x256xf32, #tpu.memory_space<vmem>>, vector<1x1x256xf32>
    %59 = vector.shape_cast %58 : vector<1x1x256xf32> to vector<1x256xf32>
    %60 = vector.broadcast %59 : vector<1x256xf32> to vector<64x256xf32>
    %61 = arith.mulf %57, %60 : vector<64x256xf32>
    %c0_32 = arith.constant 0 : index
    %c0_33 = arith.constant 0 : index
    %c0_34 = arith.constant 0 : index
    %62 = vector.load %arg4[%c0_32, %c0_33, %c0_34] : memref<9x64x1xf32, #tpu.memory_space<vmem>>, vector<1x64x1xf32>
    %63 = vector.shape_cast %62 : vector<1x64x1xf32> to vector<64x1xf32>
    %64 = vector.broadcast %63 : vector<64x1xf32> to vector<64x256xf32>
    %65 = arith.mulf %61, %64 : vector<64x256xf32>
    %66 = arith.addf %56, %65 : vector<64x256xf32>
    %c16_i32 = arith.constant 16 : i32
    %67 = tpu.dynamic_rotate %9 by %c16_i32 dim 1 : vector<64x256xf32>, i32 -> vector<64x256xf32>
    %c1_35 = arith.constant 1 : index
    %c0_36 = arith.constant 0 : index
    %c0_37 = arith.constant 0 : index
    %68 = vector.load %arg6[%c1_35, %c0_36, %c0_37] : memref<9x1x256xf32, #tpu.memory_space<vmem>>, vector<1x1x256xf32>
    %69 = vector.shape_cast %68 : vector<1x1x256xf32> to vector<1x256xf32>
    %70 = vector.broadcast %69 : vector<1x256xf32> to vector<64x256xf32>
    %71 = arith.mulf %67, %70 : vector<64x256xf32>
    %c1_38 = arith.constant 1 : index
    %c0_39 = arith.constant 0 : index
    %c0_40 = arith.constant 0 : index
    %72 = vector.load %arg4[%c1_38, %c0_39, %c0_40] : memref<9x64x1xf32, #tpu.memory_space<vmem>>, vector<1x64x1xf32>
    %73 = vector.shape_cast %72 : vector<1x64x1xf32> to vector<64x1xf32>
    %74 = vector.broadcast %73 : vector<64x1xf32> to vector<64x256xf32>
    %75 = arith.mulf %71, %74 : vector<64x256xf32>
    %76 = arith.addf %66, %75 : vector<64x256xf32>
    %c15_i32 = arith.constant 15 : i32
    %77 = tpu.dynamic_rotate %9 by %c15_i32 dim 1 : vector<64x256xf32>, i32 -> vector<64x256xf32>
    %c2 = arith.constant 2 : index
    %c0_41 = arith.constant 0 : index
    %c0_42 = arith.constant 0 : index
    %78 = vector.load %arg6[%c2, %c0_41, %c0_42] : memref<9x1x256xf32, #tpu.memory_space<vmem>>, vector<1x1x256xf32>
    %79 = vector.shape_cast %78 : vector<1x1x256xf32> to vector<1x256xf32>
    %80 = vector.broadcast %79 : vector<1x256xf32> to vector<64x256xf32>
    %81 = arith.mulf %77, %80 : vector<64x256xf32>
    %c2_43 = arith.constant 2 : index
    %c0_44 = arith.constant 0 : index
    %c0_45 = arith.constant 0 : index
    %82 = vector.load %arg4[%c2_43, %c0_44, %c0_45] : memref<9x64x1xf32, #tpu.memory_space<vmem>>, vector<1x64x1xf32>
    %83 = vector.shape_cast %82 : vector<1x64x1xf32> to vector<64x1xf32>
    %84 = vector.broadcast %83 : vector<64x1xf32> to vector<64x256xf32>
    %85 = arith.mulf %81, %84 : vector<64x256xf32>
    %86 = arith.addf %76, %85 : vector<64x256xf32>
    %c1_i32 = arith.constant 1 : i32
    %87 = tpu.dynamic_rotate %9 by %c1_i32 dim 1 : vector<64x256xf32>, i32 -> vector<64x256xf32>
    %c3 = arith.constant 3 : index
    %c0_46 = arith.constant 0 : index
    %c0_47 = arith.constant 0 : index
    %88 = vector.load %arg6[%c3, %c0_46, %c0_47] : memref<9x1x256xf32, #tpu.memory_space<vmem>>, vector<1x1x256xf32>
    %89 = vector.shape_cast %88 : vector<1x1x256xf32> to vector<1x256xf32>
    %90 = vector.broadcast %89 : vector<1x256xf32> to vector<64x256xf32>
    %91 = arith.mulf %87, %90 : vector<64x256xf32>
    %c3_48 = arith.constant 3 : index
    %c0_49 = arith.constant 0 : index
    %c0_50 = arith.constant 0 : index
    %92 = vector.load %arg4[%c3_48, %c0_49, %c0_50] : memref<9x64x1xf32, #tpu.memory_space<vmem>>, vector<1x64x1xf32>
    %93 = vector.shape_cast %92 : vector<1x64x1xf32> to vector<64x1xf32>
    %94 = vector.broadcast %93 : vector<64x1xf32> to vector<64x256xf32>
    %95 = arith.mulf %91, %94 : vector<64x256xf32>
    %96 = arith.addf %86, %95 : vector<64x256xf32>
    %c255_i32 = arith.constant 255 : i32
    %97 = tpu.dynamic_rotate %9 by %c255_i32 dim 1 : vector<64x256xf32>, i32 -> vector<64x256xf32>
    %c5 = arith.constant 5 : index
    %c0_51 = arith.constant 0 : index
    %c0_52 = arith.constant 0 : index
    %98 = vector.load %arg6[%c5, %c0_51, %c0_52] : memref<9x1x256xf32, #tpu.memory_space<vmem>>, vector<1x1x256xf32>
    %99 = vector.shape_cast %98 : vector<1x1x256xf32> to vector<1x256xf32>
    %100 = vector.broadcast %99 : vector<1x256xf32> to vector<64x256xf32>
    %101 = arith.mulf %97, %100 : vector<64x256xf32>
    %c5_53 = arith.constant 5 : index
    %c0_54 = arith.constant 0 : index
    %c0_55 = arith.constant 0 : index
    %102 = vector.load %arg4[%c5_53, %c0_54, %c0_55] : memref<9x64x1xf32, #tpu.memory_space<vmem>>, vector<1x64x1xf32>
    %103 = vector.shape_cast %102 : vector<1x64x1xf32> to vector<64x1xf32>
    %104 = vector.broadcast %103 : vector<64x1xf32> to vector<64x256xf32>
    %105 = arith.mulf %101, %104 : vector<64x256xf32>
    %106 = arith.addf %96, %105 : vector<64x256xf32>
    %c241_i32 = arith.constant 241 : i32
    %107 = tpu.dynamic_rotate %9 by %c241_i32 dim 1 : vector<64x256xf32>, i32 -> vector<64x256xf32>
    %c6 = arith.constant 6 : index
    %c0_56 = arith.constant 0 : index
    %c0_57 = arith.constant 0 : index
    %108 = vector.load %arg6[%c6, %c0_56, %c0_57] : memref<9x1x256xf32, #tpu.memory_space<vmem>>, vector<1x1x256xf32>
    %109 = vector.shape_cast %108 : vector<1x1x256xf32> to vector<1x256xf32>
    %110 = vector.broadcast %109 : vector<1x256xf32> to vector<64x256xf32>
    %111 = arith.mulf %107, %110 : vector<64x256xf32>
    %c6_58 = arith.constant 6 : index
    %c0_59 = arith.constant 0 : index
    %c0_60 = arith.constant 0 : index
    %112 = vector.load %arg4[%c6_58, %c0_59, %c0_60] : memref<9x64x1xf32, #tpu.memory_space<vmem>>, vector<1x64x1xf32>
    %113 = vector.shape_cast %112 : vector<1x64x1xf32> to vector<64x1xf32>
    %114 = vector.broadcast %113 : vector<64x1xf32> to vector<64x256xf32>
    %115 = arith.mulf %111, %114 : vector<64x256xf32>
    %116 = arith.addf %106, %115 : vector<64x256xf32>
    %c240_i32 = arith.constant 240 : i32
    %117 = tpu.dynamic_rotate %9 by %c240_i32 dim 1 : vector<64x256xf32>, i32 -> vector<64x256xf32>
    %c7 = arith.constant 7 : index
    %c0_61 = arith.constant 0 : index
    %c0_62 = arith.constant 0 : index
    %118 = vector.load %arg6[%c7, %c0_61, %c0_62] : memref<9x1x256xf32, #tpu.memory_space<vmem>>, vector<1x1x256xf32>
    %119 = vector.shape_cast %118 : vector<1x1x256xf32> to vector<1x256xf32>
    %120 = vector.broadcast %119 : vector<1x256xf32> to vector<64x256xf32>
    %121 = arith.mulf %117, %120 : vector<64x256xf32>
    %c7_63 = arith.constant 7 : index
    %c0_64 = arith.constant 0 : index
    %c0_65 = arith.constant 0 : index
    %122 = vector.load %arg4[%c7_63, %c0_64, %c0_65] : memref<9x64x1xf32, #tpu.memory_space<vmem>>, vector<1x64x1xf32>
    %123 = vector.shape_cast %122 : vector<1x64x1xf32> to vector<64x1xf32>
    %124 = vector.broadcast %123 : vector<64x1xf32> to vector<64x256xf32>
    %125 = arith.mulf %121, %124 : vector<64x256xf32>
    %126 = arith.addf %116, %125 : vector<64x256xf32>
    %c239_i32 = arith.constant 239 : i32
    %127 = tpu.dynamic_rotate %9 by %c239_i32 dim 1 : vector<64x256xf32>, i32 -> vector<64x256xf32>
    %c8 = arith.constant 8 : index
    %c0_66 = arith.constant 0 : index
    %c0_67 = arith.constant 0 : index
    %128 = vector.load %arg6[%c8, %c0_66, %c0_67] : memref<9x1x256xf32, #tpu.memory_space<vmem>>, vector<1x1x256xf32>
    %129 = vector.shape_cast %128 : vector<1x1x256xf32> to vector<1x256xf32>
    %130 = vector.broadcast %129 : vector<1x256xf32> to vector<64x256xf32>
    %131 = arith.mulf %127, %130 : vector<64x256xf32>
    %c8_68 = arith.constant 8 : index
    %c0_69 = arith.constant 0 : index
    %c0_70 = arith.constant 0 : index
    %132 = vector.load %arg4[%c8_68, %c0_69, %c0_70] : memref<9x64x1xf32, #tpu.memory_space<vmem>>, vector<1x64x1xf32>
    %133 = vector.shape_cast %132 : vector<1x64x1xf32> to vector<64x1xf32>
    %134 = vector.broadcast %133 : vector<64x1xf32> to vector<64x256xf32>
    %135 = arith.mulf %131, %134 : vector<64x256xf32>
    %136 = arith.addf %126, %135 : vector<64x256xf32>
    %137 = arith.addf %49, %136 : vector<64x256xf32>
    %c0_71 = arith.constant 0 : index
    %c0_72 = arith.constant 0 : index
    %c0_73 = arith.constant 0 : index
    %138 = vector.load %arg7[%c0_71, %c0_72, %c0_73] : memref<1x64x256xf32, #tpu.memory_space<vmem>>, vector<1x64x256xf32>
    %139 = vector.shape_cast %138 : vector<1x64x256xf32> to vector<64x256xf32>
    %140 = vector.shape_cast %137 : vector<64x256xf32> to vector<1x64x256xf32>
    tpu.vector_store %arg7[%c0_71, %c0_72, %c0_73], %140 {strides = array<i32>} : memref<1x64x256xf32, #tpu.memory_space<vmem>>, vector<1x64x256xf32>,
    return
  }
  func.func @transform_0(%arg0: i32) -> (i32, i32, i32) {
    %c0_i32 = arith.constant 0 : i32
    %c0_i32_0 = arith.constant 0 : i32
    %c0_i32_1 = arith.constant 0 : i32
    return %arg0, %c0_i32, %c0_i32_0 : i32, i32, i32
  }
  func.func @transform_1(%arg0: i32) -> (i32, i32, i32) {
    %c0_i32 = arith.constant 0 : i32
    %c0_i32_0 = arith.constant 0 : i32
    %c0_i32_1 = arith.constant 0 : i32
    %c0_i32_2 = arith.constant 0 : i32
    return %c0_i32, %c0_i32_0, %c0_i32_1 : i32, i32, i32
  }
  func.func @transform_2(%arg0: i32) -> (i32, i32, i32) {
    %c0_i32 = arith.constant 0 : i32
    %c0_i32_0 = arith.constant 0 : i32
    %c0_i32_1 = arith.constant 0 : i32
    %c0_i32_2 = arith.constant 0 : i32
    return %c0_i32, %c0_i32_0, %c0_i32_1 : i32, i32, i32
  }
  func.func @transform_3(%arg0: i32) -> (i32, i32, i32) {
    %c0_i32 = arith.constant 0 : i32
    %c0_i32_0 = arith.constant 0 : i32
    %c0_i32_1 = arith.constant 0 : i32
    %c0_i32_2 = arith.constant 0 : i32
    return %c0_i32, %c0_i32_0, %c0_i32_1 : i32, i32, i32
  }
  func.func @transform_4(%arg0: i32) -> (i32, i32) {
    %c0_i32 = arith.constant 0 : i32
    %c0_i32_0 = arith.constant 0 : i32
    %c0_i32_1 = arith.constant 0 : i32
    return %c0_i32, %c0_i32_0 : i32, i32
  }
  func.func @transform_5(%arg0: i32) -> (i32, i32, i32) {
    %c0_i32 = arith.constant 0 : i32
    %c0_i32_0 = arith.constant 0 : i32
    %c0_i32_1 = arith.constant 0 : i32
    %c0_i32_2 = arith.constant 0 : i32
    return %c0_i32, %c0_i32_0, %c0_i32_1 : i32, i32, i32
  }
  func.func @transform_6(%arg0: i32) -> (i32, i32, i32) {
    %c0_i32 = arith.constant 0 : i32
    %c0_i32_0 = arith.constant 0 : i32
    %c0_i32_1 = arith.constant 0 : i32
    return %arg0, %c0_i32, %c0_i32_0 : i32, i32, i32
  }
}

</mosaic_0001>

<llo_original>
// kernel: linear_attention2.1
$region0: #{linear_attention2.1}
  #allocation0 [shape = 'u32[]', space=smem, size = 0x4, offset = 0x4, fixed_abs, tag = 'smem constant byte address 0x4 - core index']
  #allocation1 [shape = 'u32[144,128]{1,0:T(1,128)}', space=vmem, size = 0x12000, scoped, tag = 'internal scratch']
  %s0 = inlined_call_operand.vmem [shape: f32[2,64,256], index: 0, kind: input, shape index: {}]
  %s1 = inlined_call_operand.vmem [shape: f32[2,64,32], index: 1, kind: input, shape index: {}]
  %s2 = inlined_call_operand.vmem [shape: f32[2,64,1], index: 2, kind: input, shape index: {}]
  %s3 = inlined_call_operand.vmem [shape: f32[9,64,1], index: 3, kind: input, shape index: {}]
  %s4 = inlined_call_operand.vmem [shape: f32[64,1], index: 4, kind: input, shape index: {}]
  %s5 = inlined_call_operand.vmem [shape: f32[9,1,256], index: 5, kind: input, shape index: {}]
  %s6 = inlined_call_operand.vmem [shape: f32[2,64,256], index: 6, kind: output, shape index: {}]
  %s7 = sld [smem:[#allocation0]]
  $region57: #{linear_attention2.1} parent=0
    _
  %s9 = ssub.s32 1, %s7
  %s10 = scalar_select 0, %s9, %s7
  loop: start=0, step=1, limit=4
  $region2: #{linear_attention2.1} parent=0 // loop_pre_header
    _
  $region3: #{linear_attention2.1} parent=0 // loop_header
    %s12 = sphi 0, %s16
    %p13 = scmp.ge.s32.totalorder %s12, 4
    %s22 = sphi 0, %s24
    %s25 = sphi 0, %s22
    %s26 = sphi 0, %s25
    %s42 = sphi 0, %s26
    %s46 = sphi 0, %s46
    %s48 = sphi 0, %s46
    %s49 = sphi 0, %s48
    %s63 = sphi 0, %s49
    %s67 = sphi 0, %s67
    %s69 = sphi 0, %s67
    %s70 = sphi 0, %s69
    %s84 = sphi 0, %s70
    %s88 = sphi 0, %s88
    %s90 = sphi 0, %s88
    %s91 = sphi 0, %s90
    %s105 = sphi 0, %s91
    %s109 = sphi 0, %s109
    %s111 = sphi 0, %s109
    %s112 = sphi 0, %s111
    %s126 = sphi 0, %s112
    %s130 = sphi 0, %s130
    %s132 = sphi 0, %s130
    %s133 = sphi 0, %s132
    %s147 = sphi 0, %s133
    %s153 = sphi 0, %s155
    %s156 = sphi 0, %s153
    %s157 = sphi 0, %s156
    %s173 = sphi 0, %s157
  $region4: #{linear_attention2.1} parent=0 // loop_header_branch
    %15 = sbr.rel (%p13) target = $region8
  $region5: #{linear_attention2.1} parent=0 // loop_body
    %s17 = ssub.s32 %s12, 1
    %s18 = ssub.s32 %s12, 2
    %s19 = sadd.s32 %s12, 1
    %s20 = ssub.s32 %s12, %s19
    %p21 = scmp.eq.s32.totalorder %s20, 0
    %s23 = sadd.s32 %s22, 1
    %s24 = scalar_select %p21, %s22, %s23
    %p27 = pneg %p21
    %p28 = scmp.eq.s32.totalorder %s12, 1
    %p29 = por %p27, %p28
    %p30 = scmp.ne.s32.totalorder %s22, %s25
    %p31 = scmp.eq.s32.totalorder %s12, 0
    %p32 = por %p30, %p31
    %p33 = scmp.ne.s32.totalorder %s22, %s25
    %p34 = scmp.eq.s32.totalorder %s17, 1
    %p35 = por %p33, %p34
    %p36 = scmp.ne.s32.totalorder %s25, %s26
    %p37 = scmp.eq.s32.totalorder %s17, 0
    %p38 = por %p36, %p37
    %p39 = scmp.ne.s32.totalorder %s25, %s26
    %p40 = scmp.eq.s32.totalorder %s18, 1
    %p41 = por %p39, %p40
    %p43 = scmp.ne.s32.totalorder %s26, %s42
    %p44 = scmp.eq.s32.totalorder %s18, 0
    %p45 = por %p43, %p44
    %s47 = sadd.s32 %s46, 1
    %p50 = scmp.eq.s32.totalorder %s12, 1
    %p51 = scmp.ne.s32.totalorder %s46, %s48
    %p52 = scmp.eq.s32.totalorder %s12, 0
    %p53 = por %p51, %p52
    %p54 = scmp.ne.s32.totalorder %s46, %s48
    %p55 = scmp.eq.s32.totalorder %s17, 1
    %p56 = por %p54, %p55
    %p57 = scmp.ne.s32.totalorder %s48, %s49
    %p58 = scmp.eq.s32.totalorder %s17, 0
    %p59 = por %p57, %p58
    %p60 = scmp.ne.s32.totalorder %s48, %s49
    %p61 = scmp.eq.s32.totalorder %s18, 1
    %p62 = por %p60, %p61
    %p64 = scmp.ne.s32.totalorder %s49, %s63
    %p65 = scmp.eq.s32.totalorder %s18, 0
    %p66 = por %p64, %p65
    %s68 = sadd.s32 %s67, 1
    %p71 = scmp.eq.s32.totalorder %s12, 1
    %p72 = scmp.ne.s32.totalorder %s67, %s69
    %p73 = scmp.eq.s32.totalorder %s12, 0
    %p74 = por %p72, %p73
    %p75 = scmp.ne.s32.totalorder %s67, %s69
    %p76 = scmp.eq.s32.totalorder %s17, 1
    %p77 = por %p75, %p76
    %p78 = scmp.ne.s32.totalorder %s69, %s70
    %p79 = scmp.eq.s32.totalorder %s17, 0
    %p80 = por %p78, %p79
    %p81 = scmp.ne.s32.totalorder %s69, %s70
    %p82 = scmp.eq.s32.totalorder %s18, 1
    %p83 = por %p81, %p82
    %p85 = scmp.ne.s32.totalorder %s70, %s84
    %p86 = scmp.eq.s32.totalorder %s18, 0
    %p87 = por %p85, %p86
    %s89 = sadd.s32 %s88, 1
    %p92 = scmp.eq.s32.totalorder %s12, 1
    %p93 = scmp.ne.s32.totalorder %s88, %s90
    %p94 = scmp.eq.s32.totalorder %s12, 0
    %p95 = por %p93, %p94
    %p96 = scmp.ne.s32.totalorder %s88, %s90
    %p97 = scmp.eq.s32.totalorder %s17, 1
    %p98 = por %p96, %p97
    %p99 = scmp.ne.s32.totalorder %s90, %s91
    %p100 = scmp.eq.s32.totalorder %s17, 0
    %p101 = por %p99, %p100
    %p102 = scmp.ne.s32.totalorder %s90, %s91
    %p103 = scmp.eq.s32.totalorder %s18, 1
    %p104 = por %p102, %p103
    %p106 = scmp.ne.s32.totalorder %s91, %s105
    %p107 = scmp.eq.s32.totalorder %s18, 0
    %p108 = por %p106, %p107
    %s110 = sadd.s32 %s109, 1
    %p113 = scmp.eq.s32.totalorder %s12, 1
    %p114 = scmp.ne.s32.totalorder %s109, %s111
    %p115 = scmp.eq.s32.totalorder %s12, 0
    %p116 = por %p114, %p115
    %p117 = scmp.ne.s32.totalorder %s109, %s111
    %p118 = scmp.eq.s32.totalorder %s17, 1
    %p119 = por %p117, %p118
    %p120 = scmp.ne.s32.totalorder %s111, %s112
    %p121 = scmp.eq.s32.totalorder %s17, 0
    %p122 = por %p120, %p121
    %p123 = scmp.ne.s32.totalorder %s111, %s112
    %p124 = scmp.eq.s32.totalorder %s18, 1
    %p125 = por %p123, %p124
    %p127 = scmp.ne.s32.totalorder %s112, %s126
    %p128 = scmp.eq.s32.totalorder %s18, 0
    %p129 = por %p127, %p128
    %s131 = sadd.s32 %s130, 1
    %p134 = scmp.eq.s32.totalorder %s12, 1
    %p135 = scmp.ne.s32.totalorder %s130, %s132
    %p136 = scmp.eq.s32.totalorder %s12, 0
    %p137 = por %p135, %p136
    %p138 = scmp.ne.s32.totalorder %s130, %s132
    %p139 = scmp.eq.s32.totalorder %s17, 1
    %p140 = por %p138, %p139
    %p141 = scmp.ne.s32.totalorder %s132, %s133
    %p142 = scmp.eq.s32.totalorder %s17, 0
    %p143 = por %p141, %p142
    %p144 = scmp.ne.s32.totalorder %s132, %s133
    %p145 = scmp.eq.s32.totalorder %s18, 1
    %p146 = por %p144, %p145
    %p148 = scmp.ne.s32.totalorder %s133, %s147
    %p149 = scmp.eq.s32.totalorder %s18, 0
    %p150 = por %p148, %p149
    %s151 = ssub.s32 %s12, %s19
    %p152 = scmp.eq.s32.totalorder %s151, 0
    %s154 = sadd.s32 %s153, 1
    %s155 = scalar_select %p152, %s153, %s154
    %p158 = pneg %p152
    %p159 = scmp.eq.s32.totalorder %s12, 1
    %p160 = por %p158, %p159
    %p161 = scmp.ne.s32.totalorder %s153, %s156
    %p162 = scmp.eq.s32.totalorder %s12, 0
    %p163 = por %p161, %p162
    %p164 = scmp.ne.s32.totalorder %s153, %s156
    %p165 = scmp.eq.s32.totalorder %s17, 1
    %p166 = por %p164, %p165
    %p167 = scmp.ne.s32.totalorder %s156, %s157
    %p168 = scmp.eq.s32.totalorder %s17, 0
    %p169 = por %p167, %p168
    %p170 = scmp.ne.s32.totalorder %s156, %s157
    %p171 = scmp.eq.s32.totalorder %s18, 1
    %p172 = por %p170, %p171
    %p174 = scmp.ne.s32.totalorder %s157, %s173
    %p175 = scmp.eq.s32.totalorder %s18, 0
    %p176 = por %p174, %p175
    %p177 = scmp.le.s32.totalorder 1, %s12
    %p178 = scmp.lt.s32.totalorder %s12, 3
    %p179 = pnand %p177, %p178
    %p180 = pneg %p179
    // Predicated region
    $region9: #{linear_attention2.1} parent=5 // pred_check
      _
    $region10: #{linear_attention2.1} parent=5 // pred_check_branch
      %182 = sbr.rel (%p179) target = $region12
    $region11: #{linear_attention2.1} parent=5 // pred_region
      %s183 = ssub.s32 %s12, 1
      // Predicated region
      $region13: #{linear_attention2.1} parent=11 // pred_check
        %p184 = pneg %p59
      $region14: #{linear_attention2.1} parent=11 // pred_check_branch
        %186 = sbr.rel (%p184) target = $region16
      $region15: #{linear_attention2.1} parent=11 // pred_region
        _
      $region16: #{linear_attention2.1} parent=11 // pred_fallthru
        _
      // Predicated region
      $region17: #{linear_attention2.1} parent=11 // pred_check
        %p187 = pneg %p80
      $region18: #{linear_attention2.1} parent=11 // pred_check_branch
        %189 = sbr.rel (%p187) target = $region20
      $region19: #{linear_attention2.1} parent=11 // pred_region
        _
      $region20: #{linear_attention2.1} parent=11 // pred_fallthru
        _
      // Predicated region
      $region21: #{linear_attention2.1} parent=11 // pred_check
        %p190 = pneg %p101
      $region22: #{linear_attention2.1} parent=11 // pred_check_branch
        %192 = sbr.rel (%p190) target = $region24
      $region23: #{linear_attention2.1} parent=11 // pred_region
        _
      $region24: #{linear_attention2.1} parent=11 // pred_fallthru
        _
      // Predicated region
      $region25: #{linear_attention2.1} parent=11 // pred_check
        %p193 = pneg %p122
      $region26: #{linear_attention2.1} parent=11 // pred_check_branch
        %195 = sbr.rel (%p193) target = $region28
      $region27: #{linear_attention2.1} parent=11 // pred_region
        _
      $region28: #{linear_attention2.1} parent=11 // pred_fallthru
        _
      // Predicated region
      $region29: #{linear_attention2.1} parent=11 // pred_check
        %p196 = pneg %p143
      $region30: #{linear_attention2.1} parent=11 // pred_check_branch
        %198 = sbr.rel (%p196) target = $region32
      $region31: #{linear_attention2.1} parent=11 // pred_region
        _
      $region32: #{linear_attention2.1} parent=11 // pred_fallthru
        _
    $region12: #{linear_attention2.1} parent=5 // pred_fallthru
      _
    %p199 = scmp.lt.s32.totalorder %s12, 2
    // Predicated region
    $region33: #{linear_attention2.1} parent=5 // pred_check
      %p200 = pneg %p199
    $region34: #{linear_attention2.1} parent=5 // pred_check_branch
      %202 = sbr.rel (%p200) target = $region36
    $region35: #{linear_attention2.1} parent=5 // pred_region
      // Predicated region
      $region37: #{linear_attention2.1} parent=35 // pred_check
        %p203 = pneg %p32
      $region38: #{linear_attention2.1} parent=35 // pred_check_branch
        %205 = sbr.rel (%p203) target = $region40
      $region39: #{linear_attention2.1} parent=35 // pred_region
        %p206 = scmp.lt.s32.totalorder %s12, 1
        %s207 = scalar_select %p206, %s12, 1
        %s208 = smul.addr %s207, 16
        %s209 = smul.addr %s208, 8
        %s210 = scalar_lea.vmem %s0, %s209
      $region40: #{linear_attention2.1} parent=35 // pred_fallthru
        _
    $region36: #{linear_attention2.1} parent=5 // pred_fallthru
      _
    %p211 = scmp.le.s32.totalorder 1, %s12
    %p212 = scmp.lt.s32.totalorder %s12, 3
    %p213 = pnand %p211, %p212
    %p214 = pneg %p213
    // Predicated region
    $region41: #{linear_attention2.1} parent=5 // pred_check
      _
    $region42: #{linear_attention2.1} parent=5 // pred_check_branch
      %216 = sbr.rel (%p213) target = $region44
    $region43: #{linear_attention2.1} parent=5 // pred_region
      %s217 = ssub.s32 %s12, 1
      %p218 = scmp.lt.s32.totalorder %s17, 1
      %s219 = scalar_select %p218, %s17, 1
      %s220 = smul.addr %s219, 16
      %s221 = smul.addr %s220, 8
      %s222 = scalar_lea.vmem %s0, %s221
      %p223 = pneg %p38
      %p224 = pneg %p35
      %p225 = pneg %p59
      %p226 = pneg %p56
      %p227 = pneg %p80
      %p228 = pneg %p77
      %p229 = pneg %p101
      %p230 = pneg %p98
      %p231 = pneg %p122
      %p232 = pneg %p119
      %p233 = pneg %p143
      %p234 = pneg %p140
      %p235 = pneg %p169
      %p236 = pneg %p166
      %p237 = scmp.lt.s32.totalorder %s17, 1
      %s238 = scalar_select %p237, %s17, 1
      %s239 = smul.addr %s238, 16
      %s240 = smul.addr %s239, 8
      %s241 = scalar_lea.vmem %s6, %s240
      %p242 = scmp.lt.s32.totalorder %s17, 1
      %s243 = scalar_select %p242, %s17, 1
      %s244 = smul.addr %s243, 16
      %s245 = smul.addr %s244, 8
      %s246 = scalar_lea.vmem %s0, %s245
      %p247 = scmp.lt.s32.totalorder %s17, 1
      %s248 = scalar_select %p247, %s17, 1
      %s249 = smul.addr %s248, 16
      %s250 = smul.addr %s249, 8
      %s251 = scalar_lea.vmem %s6, %s250
      %v252 = vld [vmem:[%s1] sm:$0xff]
      %v253 = vld [vmem:[%s1 + $0x8] sm:$0xff]
      %v254 = vld [vmem:[%s1 + $0x10] sm:$0xff]
      %v255 = vld [vmem:[%s1 + $0x18] sm:$0xff]
      %v256 = vld [vmem:[%s1 + $0x20] sm:$0xff]
      %v257 = vld [vmem:[%s1 + $0x28] sm:$0xff]
      %v258 = vld [vmem:[%s1 + $0x30] sm:$0xff]
      %v259 = vld [vmem:[%s1 + $0x38] sm:$0xff]
      %s260 = scalar_lea.vmem %s1, 64
      %v261 = vld [vmem:[%s260] sm:$0xff]
      %v262 = vld [vmem:[%s260 + $0x8] sm:$0xff]
      %v263 = vld [vmem:[%s260 + $0x10] sm:$0xff]
      %v264 = vld [vmem:[%s260 + $0x18] sm:$0xff]
      %v265 = vld [vmem:[%s260 + $0x20] sm:$0xff]
      %v266 = vld [vmem:[%s260 + $0x28] sm:$0xff]
      %v267 = vld [vmem:[%s260 + $0x30] sm:$0xff]
      %v268 = vld [vmem:[%s260 + $0x38] sm:$0xff]
      %v269 = vld [vmem:[%s2] sm:$0xff]
      %v270 = vld [vmem:[%s2 + $0x8] sm:$0xff]
      %v271 = vld [vmem:[%s2 + $0x10] sm:$0xff]
      %v272 = vld [vmem:[%s2 + $0x18] sm:$0xff]
      %v273 = vld [vmem:[%s2 + $0x20] sm:$0xff]
      %v274 = vld [vmem:[%s2 + $0x28] sm:$0xff]
      %v275 = vld [vmem:[%s2 + $0x30] sm:$0xff]
      %v276 = vld [vmem:[%s2 + $0x38] sm:$0xff]
      %s277 = scalar_lea.vmem %s2, 64
      %v278 = vld [vmem:[%s277] sm:$0xff]
      %v279 = vld [vmem:[%s277 + $0x8] sm:$0xff]
      %v280 = vld [vmem:[%s277 + $0x10] sm:$0xff]
      %v281 = vld [vmem:[%s277 + $0x18] sm:$0xff]
      %v282 = vld [vmem:[%s277 + $0x20] sm:$0xff]
      %v283 = vld [vmem:[%s277 + $0x28] sm:$0xff]
      %v284 = vld [vmem:[%s277 + $0x30] sm:$0xff]
      %v285 = vld [vmem:[%s277 + $0x38] sm:$0xff]
      %v286 = vld [vmem:[%s246] sm:$0xff]
      %v287 = vld [vmem:[%s246 + $0x8] sm:$0xff]
      %v288 = vld [vmem:[%s246 + $0x10] sm:$0xff]
      %v289 = vld [vmem:[%s246 + $0x18] sm:$0xff]
      %v290 = vld [vmem:[%s246 + $0x20] sm:$0xff]
      %v291 = vld [vmem:[%s246 + $0x28] sm:$0xff]
      %v292 = vld [vmem:[%s246 + $0x30] sm:$0xff]
      %v293 = vld [vmem:[%s246 + $0x38] sm:$0xff]
      %v294 = vld [vmem:[%s246 + $0x40] sm:$0xff]
      %v295 = vld [vmem:[%s246 + $0x48] sm:$0xff]
      %v296 = vld [vmem:[%s246 + $0x50] sm:$0xff]
      %v297 = vld [vmem:[%s246 + $0x58] sm:$0xff]
      %v298 = vld [vmem:[%s246 + $0x60] sm:$0xff]
      %v299 = vld [vmem:[%s246 + $0x68] sm:$0xff]
      %v300 = vld [vmem:[%s246 + $0x70] sm:$0xff]
      %v301 = vld [vmem:[%s246 + $0x78] sm:$0xff]
      %303 = vset.pattern.permute.xlu0 0
      %304 = vperm.xlu0 %303, %v269
      %v305 = vpop.permute.xlu0 %304
      %308 = vset.pattern.permute.xlu0 0
      %309 = vperm.xlu0 %308, %v270
      %v310 = vpop.permute.xlu0 %309
      %313 = vset.pattern.permute.xlu0 0
      %314 = vperm.xlu0 %313, %v271
      %v315 = vpop.permute.xlu0 %314
      %318 = vset.pattern.permute.xlu0 0
      %319 = vperm.xlu0 %318, %v272
      %v320 = vpop.permute.xlu0 %319
      %323 = vset.pattern.permute.xlu0 0
      %324 = vperm.xlu0 %323, %v273
      %v325 = vpop.permute.xlu0 %324
      %328 = vset.pattern.permute.xlu0 0
      %329 = vperm.xlu0 %328, %v274
      %v330 = vpop.permute.xlu0 %329
      %333 = vset.pattern.permute.xlu0 0
      %334 = vperm.xlu0 %333, %v275
      %v335 = vpop.permute.xlu0 %334
      %338 = vset.pattern.permute.xlu0 0
      %339 = vperm.xlu0 %338, %v276
      %v340 = vpop.permute.xlu0 %339
      %vm342 = vcmask 261120
      %v344 = vsel %vm342, %v252, 0
      %v347 = vsel %vm342, %v253, 0
      %v350 = vsel %vm342, %v254, 0
      %v353 = vsel %vm342, %v255, 0
      %v356 = vsel %vm342, %v256, 0
      %v359 = vsel %vm342, %v257, 0
      %v362 = vsel %vm342, %v258, 0
      %v365 = vsel %vm342, %v259, 0
      %367 = vmatprep.subr.mxu0 %v287
      %368 = vmatpush1.msra.mxu0 %v286
      %369 = vmatprep.subr.mxu0 %v289
      %370 = vmatpush1.msra.mxu0 %v288
      %371 = vmatprep.subr.mxu0 %v291
      %372 = vmatpush1.msra.mxu0 %v290
      %373 = vmatprep.subr.mxu0 %v293
      %374 = vmatpush1.msra.mxu0 %v292
      %375 = vmatprep.subr.mxu0 0.0
      %376 = vmatpush1.msra.mxu0 0.0
      %377 = vmatprep.subr.mxu0 0.0
      %378 = vmatpush1.msra.mxu0 0.0
      %379 = vmatprep.subr.mxu0 0.0
      %380 = vmatpush1.msra.mxu0 0.0
      %381 = vmatprep.subr.mxu0 0.0
      %382 = vmatpush1.msra.mxu0 0.0
      %383 = vmatprep.subr.mxu0 0.0
      %384 = vmatpush1.msra.mxu0 0.0
      %385 = vmatprep.subr.mxu0 0.0
      %386 = vmatpush1.msra.mxu0 0.0
      %387 = vmatprep.subr.mxu0 0.0
      %388 = vmatpush1.msra.mxu0 0.0
      %389 = vmatprep.subr.mxu0 0.0
      %390 = vmatpush1.msra.mxu0 0.0
      %391 = vmatprep.subr.mxu0 0.0
      %392 = vmatpush1.msra.mxu0 0.0
      %393 = vmatprep.subr.mxu0 0.0
      %394 = vmatpush1.msra.mxu0 0.0
      %395 = vmatprep.subr.mxu0 0.0
      %396 = vmatpush1.msra.mxu0 0.0
      %397 = vmatprep.subr.mxu0 0.0
      %398 = vmatpush1.msra.mxu0 0.0
      %399 = vmatprep.subr.mxu0 0.0
      %400 = vmatpush1.msra.mxu0 0.0
      %401 = vmatprep.subr.mxu0 0.0
      %402 = vmatpush1.msra.mxu0 0.0
      %403 = vmatprep.subr.mxu0 0.0
      %404 = vmatpush1.msra.mxu0 0.0
      %405 = vmatprep.subr.mxu0 0.0
      %406 = vmatpush1.msra.mxu0 0.0
      %407 = vmatprep.subr.mxu0 0.0
      %408 = vmatpush1.msra.mxu0 0.0
      %409 = vmatprep.subr.mxu0 0.0
      %410 = vmatpush1.msra.mxu0 0.0
      %411 = vmatprep.subr.mxu0 0.0
      %412 = vmatpush1.msra.mxu0 0.0
      %413 = vmatprep.subr.mxu0 0.0
      %414 = vmatpush1.msra.mxu0 0.0
      %415 = vmatprep.subr.mxu0 0.0
      %416 = vmatpush1.msra.mxu0 0.0
      %417 = vmatprep.subr.mxu0 0.0
      %418 = vmatpush1.msra.mxu0 0.0
      %419 = vmatprep.subr.mxu0 0.0
      %420 = vmatpush1.msra.mxu0 0.0
      %421 = vmatprep.subr.mxu0 0.0
      %422 = vmatpush1.msra.mxu0 0.0
      %423 = vmatprep.subr.mxu0 0.0
      %424 = vmatpush1.msra.mxu0 0.0
      %425 = vmatprep.subr.mxu0 0.0
      %426 = vmatpush1.msra.mxu0 0.0
      %427 = vmatprep.subr.mxu0 0.0
      %428 = vmatpush1.msra.mxu0 0.0
      %429 = vmatprep.subr.mxu0 0.0
      %430 = vmatpush1.msra.mxu0 0.0
      %431 = vmatprep.mubr.f32.mxu0 0.0
      %432 = vmatmul.mubr.f32.gmra.mrb[0].mxu0 %v344
      %v433 = vpop.f32.mrb[0].mxu0
      %v434 = vadd.f32 %v305, %v433
      %v435 = vpop.f32.mrb[0].mxu0
      %v436 = vadd.f32 %v305, %v435
      %437 = vmatprep.mubr.f32.mxu0 0.0
      %438 = vmatmul.mubr.f32.gmra.mrb[0].mxu0 %v347
      %v439 = vpop.f32.mrb[0].mxu0
      %v440 = vadd.f32 %v310, %v439
      %v441 = vpop.f32.mrb[0].mxu0
      %v442 = vadd.f32 %v310, %v441
      %443 = vmatprep.mubr.f32.mxu0 0.0
      %444 = vmatmul.mubr.f32.gmra.mrb[0].mxu0 %v350
      %v445 = vpop.f32.mrb[0].mxu0
      %v446 = vadd.f32 %v315, %v445
      %v447 = vpop.f32.mrb[0].mxu0
      %v448 = vadd.f32 %v315, %v447
      %449 = vmatprep.mubr.f32.mxu0 0.0
      %450 = vmatmul.mubr.f32.gmra.mrb[0].mxu0 %v353
      %v451 = vpop.f32.mrb[0].mxu0
      %v452 = vadd.f32 %v320, %v451
      %v453 = vpop.f32.mrb[0].mxu0
      %v454 = vadd.f32 %v320, %v453
      %455 = vmatprep.mubr.f32.mxu0 0.0
      %456 = vmatmul.mubr.f32.gmra.mrb[0].mxu0 %v356
      %v457 = vpop.f32.mrb[0].mxu0
      %v458 = vadd.f32 %v325, %v457
      %v459 = vpop.f32.mrb[0].mxu0
      %v460 = vadd.f32 %v325, %v459
      %461 = vmatprep.mubr.f32.mxu0 0.0
      %462 = vmatmul.mubr.f32.gmra.mrb[0].mxu0 %v359
      %v463 = vpop.f32.mrb[0].mxu0
      %v464 = vadd.f32 %v330, %v463
      %v465 = vpop.f32.mrb[0].mxu0
      %v466 = vadd.f32 %v330, %v465
      %467 = vmatprep.mubr.f32.mxu0 0.0
      %468 = vmatmul.mubr.f32.gmra.mrb[0].mxu0 %v362
      %v469 = vpop.f32.mrb[0].mxu0
      %v470 = vadd.f32 %v335, %v469
      %v471 = vpop.f32.mrb[0].mxu0
      %v472 = vadd.f32 %v335, %v471
      %473 = vmatprep.mubr.f32.mxu0 0.0
      %474 = vmatmul.mubr.f32.gmra.mrb[0].mxu0 %v365
      %v475 = vpop.f32.mrb[0].mxu0
      %v476 = vadd.f32 %v340, %v475
      %v477 = vpop.f32.mrb[0].mxu0
      %v478 = vadd.f32 %v340, %v477
      %479 = vdwg.mxu0
      %481 = vset.pattern.permute.xlu0 0
      %482 = vperm.xlu0 %481, %v278
      %v483 = vpop.permute.xlu0 %482
      %486 = vset.pattern.permute.xlu0 0
      %487 = vperm.xlu0 %486, %v279
      %v488 = vpop.permute.xlu0 %487
      %491 = vset.pattern.permute.xlu0 0
      %492 = vperm.xlu0 %491, %v280
      %v493 = vpop.permute.xlu0 %492
      %496 = vset.pattern.permute.xlu0 0
      %497 = vperm.xlu0 %496, %v281
      %v498 = vpop.permute.xlu0 %497
      %501 = vset.pattern.permute.xlu0 0
      %502 = vperm.xlu0 %501, %v282
      %v503 = vpop.permute.xlu0 %502
      %506 = vset.pattern.permute.xlu0 0
      %507 = vperm.xlu0 %506, %v283
      %v508 = vpop.permute.xlu0 %507
      %511 = vset.pattern.permute.xlu0 0
      %512 = vperm.xlu0 %511, %v284
      %v513 = vpop.permute.xlu0 %512
      %516 = vset.pattern.permute.xlu0 0
      %517 = vperm.xlu0 %516, %v285
      %v518 = vpop.permute.xlu0 %517
      %v521 = vsel %vm342, %v261, 0
      %v524 = vsel %vm342, %v262, 0
      %v527 = vsel %vm342, %v263, 0
      %v530 = vsel %vm342, %v264, 0
      %v533 = vsel %vm342, %v265, 0
      %v536 = vsel %vm342, %v266, 0
      %v539 = vsel %vm342, %v267, 0
      %v542 = vsel %vm342, %v268, 0
      %544 = vmatprep.subr.mxu0 %v295
      %545 = vmatpush1.msra.mxu0 %v294
      %546 = vmatprep.subr.mxu0 %v297
      %547 = vmatpush1.msra.mxu0 %v296
      %548 = vmatprep.subr.mxu0 %v299
      %549 = vmatpush1.msra.mxu0 %v298
      %550 = vmatprep.subr.mxu0 %v301
      %551 = vmatpush1.msra.mxu0 %v300
      %552 = vmatprep.subr.mxu0 0.0
      %553 = vmatpush1.msra.mxu0 0.0
      %554 = vmatprep.subr.mxu0 0.0
      %555 = vmatpush1.msra.mxu0 0.0
      %556 = vmatprep.subr.mxu0 0.0
      %557 = vmatpush1.msra.mxu0 0.0
      %558 = vmatprep.subr.mxu0 0.0
      %559 = vmatpush1.msra.mxu0 0.0
      %560 = vmatprep.subr.mxu0 0.0
      %561 = vmatpush1.msra.mxu0 0.0
      %562 = vmatprep.subr.mxu0 0.0
      %563 = vmatpush1.msra.mxu0 0.0
      %564 = vmatprep.subr.mxu0 0.0
      %565 = vmatpush1.msra.mxu0 0.0
      %566 = vmatprep.subr.mxu0 0.0
      %567 = vmatpush1.msra.mxu0 0.0
      %568 = vmatprep.subr.mxu0 0.0
      %569 = vmatpush1.msra.mxu0 0.0
      %570 = vmatprep.subr.mxu0 0.0
      %571 = vmatpush1.msra.mxu0 0.0
      %572 = vmatprep.subr.mxu0 0.0
      %573 = vmatpush1.msra.mxu0 0.0
      %574 = vmatprep.subr.mxu0 0.0
      %575 = vmatpush1.msra.mxu0 0.0
      %576 = vmatprep.subr.mxu0 0.0
      %577 = vmatpush1.msra.mxu0 0.0
      %578 = vmatprep.subr.mxu0 0.0
      %579 = vmatpush1.msra.mxu0 0.0
      %580 = vmatprep.subr.mxu0 0.0
      %581 = vmatpush1.msra.mxu0 0.0
      %582 = vmatprep.subr.mxu0 0.0
      %583 = vmatpush1.msra.mxu0 0.0
      %584 = vmatprep.subr.mxu0 0.0
      %585 = vmatpush1.msra.mxu0 0.0
      %586 = vmatprep.subr.mxu0 0.0
      %587 = vmatpush1.msra.mxu0 0.0
      %588 = vmatprep.subr.mxu0 0.0
      %589 = vmatpush1.msra.mxu0 0.0
      %590 = vmatprep.subr.mxu0 0.0
      %591 = vmatpush1.msra.mxu0 0.0
      %592 = vmatprep.subr.mxu0 0.0
      %593 = vmatpush1.msra.mxu0 0.0
      %594 = vmatprep.subr.mxu0 0.0
      %595 = vmatpush1.msra.mxu0 0.0
      %596 = vmatprep.subr.mxu0 0.0
      %597 = vmatpush1.msra.mxu0 0.0
      %598 = vmatprep.subr.mxu0 0.0
      %599 = vmatpush1.msra.mxu0 0.0
      %600 = vmatprep.subr.mxu0 0.0
      %601 = vmatpush1.msra.mxu0 0.0
      %602 = vmatprep.subr.mxu0 0.0
      %603 = vmatpush1.msra.mxu0 0.0
      %604 = vmatprep.subr.mxu0 0.0
      %605 = vmatpush1.msra.mxu0 0.0
      %606 = vmatprep.subr.mxu0 0.0
      %607 = vmatpush1.msra.mxu0 0.0
      %608 = vmatprep.mubr.f32.mxu0 0.0
      %609 = vmatmul.mubr.f32.gmra.mrb[0].mxu0 %v521
      %v610 = vpop.f32.mrb[0].mxu0
      %v611 = vadd.f32 %v483, %v610
      %v612 = vpop.f32.mrb[0].mxu0
      %v613 = vadd.f32 %v483, %v612
      %614 = vmatprep.mubr.f32.mxu0 0.0
      %615 = vmatmul.mubr.f32.gmra.mrb[0].mxu0 %v524
      %v616 = vpop.f32.mrb[0].mxu0
      %v617 = vadd.f32 %v488, %v616
      %v618 = vpop.f32.mrb[0].mxu0
      %v619 = vadd.f32 %v488, %v618
      %620 = vmatprep.mubr.f32.mxu0 0.0
      %621 = vmatmul.mubr.f32.gmra.mrb[0].mxu0 %v527
      %v622 = vpop.f32.mrb[0].mxu0
      %v623 = vadd.f32 %v493, %v622
      %v624 = vpop.f32.mrb[0].mxu0
      %v625 = vadd.f32 %v493, %v624
      %626 = vmatprep.mubr.f32.mxu0 0.0
      %627 = vmatmul.mubr.f32.gmra.mrb[0].mxu0 %v530
      %v628 = vpop.f32.mrb[0].mxu0
      %v629 = vadd.f32 %v498, %v628
      %v630 = vpop.f32.mrb[0].mxu0
      %v631 = vadd.f32 %v498, %v630
      %632 = vmatprep.mubr.f32.mxu0 0.0
      %633 = vmatmul.mubr.f32.gmra.mrb[0].mxu0 %v533
      %v634 = vpop.f32.mrb[0].mxu0
      %v635 = vadd.f32 %v503, %v634
      %v636 = vpop.f32.mrb[0].mxu0
      %v637 = vadd.f32 %v503, %v636
      %638 = vmatprep.mubr.f32.mxu0 0.0
      %639 = vmatmul.mubr.f32.gmra.mrb[0].mxu0 %v536
      %v640 = vpop.f32.mrb[0].mxu0
      %v641 = vadd.f32 %v508, %v640
      %v642 = vpop.f32.mrb[0].mxu0
      %v643 = vadd.f32 %v508, %v642
      %644 = vmatprep.mubr.f32.mxu0 0.0
      %645 = vmatmul.mubr.f32.gmra.mrb[0].mxu0 %v539
      %v646 = vpop.f32.mrb[0].mxu0
      %v647 = vadd.f32 %v513, %v646
      %v648 = vpop.f32.mrb[0].mxu0
      %v649 = vadd.f32 %v513, %v648
      %650 = vmatprep.mubr.f32.mxu0 0.0
      %651 = vmatmul.mubr.f32.gmra.mrb[0].mxu0 %v542
      %v652 = vpop.f32.mrb[0].mxu0
      %v653 = vadd.f32 %v518, %v652
      %v654 = vpop.f32.mrb[0].mxu0
      %v655 = vadd.f32 %v518, %v654
      %656 = vdwg.mxu0
      %vm657 = vcmp.gt.f32.partialorder %v434, 0.0
      %vm658 = vcmp.gt.f32.partialorder %v436, 0.0
      %vm659 = vcmp.gt.f32.partialorder %v440, 0.0
      %vm660 = vcmp.gt.f32.partialorder %v442, 0.0
      %vm661 = vcmp.gt.f32.partialorder %v446, 0.0
      %vm662 = vcmp.gt.f32.partialorder %v448, 0.0
      %vm663 = vcmp.gt.f32.partialorder %v452, 0.0
      %vm664 = vcmp.gt.f32.partialorder %v454, 0.0
      %vm665 = vcmp.gt.f32.partialorder %v458, 0.0
      %vm666 = vcmp.gt.f32.partialorder %v460, 0.0
      %vm667 = vcmp.gt.f32.partialorder %v464, 0.0
      %vm668 = vcmp.gt.f32.partialorder %v466, 0.0
      %vm669 = vcmp.gt.f32.partialorder %v470, 0.0
      %vm670 = vcmp.gt.f32.partialorder %v472, 0.0
      %vm671 = vcmp.gt.f32.partialorder %v476, 0.0
      %vm672 = vcmp.gt.f32.partialorder %v478, 0.0
      %v673 = vadd.f32 %v434, 1.0
      %v674 = vadd.f32 %v436, 1.0
      %v675 = vadd.f32 %v440, 1.0
      %v676 = vadd.f32 %v442, 1.0
      %v677 = vadd.f32 %v446, 1.0
      %v678 = vadd.f32 %v448, 1.0
      %v679 = vadd.f32 %v452, 1.0
      %v680 = vadd.f32 %v454, 1.0
      %v681 = vadd.f32 %v458, 1.0
      %v682 = vadd.f32 %v460, 1.0
      %v683 = vadd.f32 %v464, 1.0
      %v684 = vadd.f32 %v466, 1.0
      %v685 = vadd.f32 %v470, 1.0
      %v686 = vadd.f32 %v472, 1.0
      %v687 = vadd.f32 %v476, 1.0
      %v688 = vadd.f32 %v478, 1.0
      %v689 = vmul.f32 %v434, 1.442695
      %v690 = vpow.pop %v689
      %v691 = vmul.f32 %v436, 1.442695
      %v692 = vpow.pop %v691
      %v693 = vmul.f32 %v440, 1.442695
      %v694 = vpow.pop %v693
      %v695 = vmul.f32 %v442, 1.442695
      %v696 = vpow.pop %v695
      %v697 = vmul.f32 %v446, 1.442695
      %v698 = vpow.pop %v697
      %v699 = vmul.f32 %v448, 1.442695
      %v700 = vpow.pop %v699
      %v701 = vmul.f32 %v452, 1.442695
      %v702 = vpow.pop %v701
      %v703 = vmul.f32 %v454, 1.442695
      %v704 = vpow.pop %v703
      %v705 = vmul.f32 %v458, 1.442695
      %v706 = vpow.pop %v705
      %v707 = vmul.f32 %v460, 1.442695
      %v708 = vpow.pop %v707
      %v709 = vmul.f32 %v464, 1.442695
      %v710 = vpow.pop %v709
      %v711 = vmul.f32 %v466, 1.442695
      %v712 = vpow.pop %v711
      %v713 = vmul.f32 %v470, 1.442695
      %v714 = vpow.pop %v713
      %v715 = vmul.f32 %v472, 1.442695
      %v716 = vpow.pop %v715
      %v717 = vmul.f32 %v476, 1.442695
      %v718 = vpow.pop %v717
      %v719 = vmul.f32 %v478, 1.442695
      %v720 = vpow.pop %v719
      %v721 = vsel %vm657, %v673, %v690
      %v722 = vsel %vm658, %v674, %v692
      %v723 = vsel %vm659, %v675, %v694
      %v724 = vsel %vm660, %v676, %v696
      %v725 = vsel %vm661, %v677, %v698
      %v726 = vsel %vm662, %v678, %v700
      %v727 = vsel %vm663, %v679, %v702
      %v728 = vsel %vm664, %v680, %v704
      %v729 = vsel %vm665, %v681, %v706
      %v730 = vsel %vm666, %v682, %v708
      %v731 = vsel %vm667, %v683, %v710
      %v732 = vsel %vm668, %v684, %v712
      %v733 = vsel %vm669, %v685, %v714
      %v734 = vsel %vm670, %v686, %v716
      %v735 = vsel %vm671, %v687, %v718
      %v736 = vsel %vm672, %v688, %v720
      %vm737 = vcmp.gt.f32.partialorder %v611, 0.0
      %vm738 = vcmp.gt.f32.partialorder %v613, 0.0
      %vm739 = vcmp.gt.f32.partialorder %v617, 0.0
      %vm740 = vcmp.gt.f32.partialorder %v619, 0.0
      %vm741 = vcmp.gt.f32.partialorder %v623, 0.0
      %vm742 = vcmp.gt.f32.partialorder %v625, 0.0
      %vm743 = vcmp.gt.f32.partialorder %v629, 0.0
      %vm744 = vcmp.gt.f32.partialorder %v631, 0.0
      %vm745 = vcmp.gt.f32.partialorder %v635, 0.0
      %vm746 = vcmp.gt.f32.partialorder %v637, 0.0
      %vm747 = vcmp.gt.f32.partialorder %v641, 0.0
      %vm748 = vcmp.gt.f32.partialorder %v643, 0.0
      %vm749 = vcmp.gt.f32.partialorder %v647, 0.0
      %vm750 = vcmp.gt.f32.partialorder %v649, 0.0
      %vm751 = vcmp.gt.f32.partialorder %v653, 0.0
      %vm752 = vcmp.gt.f32.partialorder %v655, 0.0
      %v753 = vadd.f32 %v611, 1.0
      %v754 = vadd.f32 %v613, 1.0
      %v755 = vadd.f32 %v617, 1.0
      %v756 = vadd.f32 %v619, 1.0
      %v757 = vadd.f32 %v623, 1.0
      %v758 = vadd.f32 %v625, 1.0
      %v759 = vadd.f32 %v629, 1.0
      %v760 = vadd.f32 %v631, 1.0
      %v761 = vadd.f32 %v635, 1.0
      %v762 = vadd.f32 %v637, 1.0
      %v763 = vadd.f32 %v641, 1.0
      %v764 = vadd.f32 %v643, 1.0
      %v765 = vadd.f32 %v647, 1.0
      %v766 = vadd.f32 %v649, 1.0
      %v767 = vadd.f32 %v653, 1.0
      %v768 = vadd.f32 %v655, 1.0
      %v769 = vmul.f32 %v611, 1.442695
      %v770 = vpow.pop %v769
      %v771 = vmul.f32 %v613, 1.442695
      %v772 = vpow.pop %v771
      %v773 = vmul.f32 %v617, 1.442695
      %v774 = vpow.pop %v773
      %v775 = vmul.f32 %v619, 1.442695
      %v776 = vpow.pop %v775
      %v777 = vmul.f32 %v623, 1.442695
      %v778 = vpow.pop %v777
      %v779 = vmul.f32 %v625, 1.442695
      %v780 = vpow.pop %v779
      %v781 = vmul.f32 %v629, 1.442695
      %v782 = vpow.pop %v781
      %v783 = vmul.f32 %v631, 1.442695
      %v784 = vpow.pop %v783
      %v785 = vmul.f32 %v635, 1.442695
      %v786 = vpow.pop %v785
      %v787 = vmul.f32 %v637, 1.442695
      %v788 = vpow.pop %v787
      %v789 = vmul.f32 %v641, 1.442695
      %v790 = vpow.pop %v789
      %v791 = vmul.f32 %v643, 1.442695
      %v792 = vpow.pop %v791
      %v793 = vmul.f32 %v647, 1.442695
      %v794 = vpow.pop %v793
      %v795 = vmul.f32 %v649, 1.442695
      %v796 = vpow.pop %v795
      %v797 = vmul.f32 %v653, 1.442695
      %v798 = vpow.pop %v797
      %v799 = vmul.f32 %v655, 1.442695
      %v800 = vpow.pop %v799
      %v801 = vsel %vm737, %v753, %v770
      %v802 = vsel %vm738, %v754, %v772
      %v803 = vsel %vm739, %v755, %v774
      %v804 = vsel %vm740, %v756, %v776
      %v805 = vsel %vm741, %v757, %v778
      %v806 = vsel %vm742, %v758, %v780
      %v807 = vsel %vm743, %v759, %v782
      %v808 = vsel %vm744, %v760, %v784
      %v809 = vsel %vm745, %v761, %v786
      %v810 = vsel %vm746, %v762, %v788
      %v811 = vsel %vm747, %v763, %v790
      %v812 = vsel %vm748, %v764, %v792
      %v813 = vsel %vm749, %v765, %v794
      %v814 = vsel %vm750, %v766, %v796
      %v815 = vsel %vm751, %v767, %v798
      %v816 = vsel %vm752, %v768, %v800
      %817 = vmatprep.subr.mxu0 %v802
      %818 = vmatpush1.xpose.msra.mxu0 %v801
      %819 = vmatprep.subr.mxu0 %v804
      %820 = vmatpush1.xpose.msra.mxu0 %v803
      %821 = vmatprep.subr.mxu0 %v806
      %822 = vmatpush1.xpose.msra.mxu0 %v805
      %823 = vmatprep.subr.mxu0 %v808
      %824 = vmatpush1.xpose.msra.mxu0 %v807
      %825 = vmatprep.subr.mxu0 0.0
      %826 = vmatpush1.xpose.msra.mxu0 0.0
      %827 = vmatprep.subr.mxu0 0.0
      %828 = vmatpush1.xpose.msra.mxu0 0.0
      %829 = vmatprep.subr.mxu0 0.0
      %830 = vmatpush1.xpose.msra.mxu0 0.0
      %831 = vmatprep.subr.mxu0 0.0
      %832 = vmatpush1.xpose.msra.mxu0 0.0
      %833 = vmatprep.subr.mxu0 0.0
      %834 = vmatpush1.xpose.msra.mxu0 0.0
      %835 = vmatprep.subr.mxu0 0.0
      %836 = vmatpush1.xpose.msra.mxu0 0.0
      %837 = vmatprep.subr.mxu0 0.0
      %838 = vmatpush1.xpose.msra.mxu0 0.0
      %839 = vmatprep.subr.mxu0 0.0
      %840 = vmatpush1.xpose.msra.mxu0 0.0
      %841 = vmatprep.subr.mxu0 0.0
      %842 = vmatpush1.xpose.msra.mxu0 0.0
      %843 = vmatprep.subr.mxu0 0.0
      %844 = vmatpush1.xpose.msra.mxu0 0.0
      %845 = vmatprep.subr.mxu0 0.0
      %846 = vmatpush1.xpose.msra.mxu0 0.0
      %847 = vmatprep.subr.mxu0 0.0
      %848 = vmatpush1.xpose.msra.mxu0 0.0
      %849 = vmatprep.subr.mxu0 0.0
      %850 = vmatpush1.xpose.msra.mxu0 0.0
      %851 = vmatprep.subr.mxu0 0.0
      %852 = vmatpush1.xpose.msra.mxu0 0.0
      %853 = vmatprep.subr.mxu0 0.0
      %854 = vmatpush1.xpose.msra.mxu0 0.0
      %855 = vmatprep.subr.mxu0 0.0
      %856 = vmatpush1.xpose.msra.mxu0 0.0
      %857 = vmatprep.subr.mxu0 0.0
      %858 = vmatpush1.xpose.msra.mxu0 0.0
      %859 = vmatprep.subr.mxu0 0.0
      %860 = vmatpush1.xpose.msra.mxu0 0.0
      %861 = vmatprep.subr.mxu0 0.0
      %862 = vmatpush1.xpose.msra.mxu0 0.0
      %863 = vmatprep.subr.mxu0 0.0
      %864 = vmatpush1.xpose.msra.mxu0 0.0
      %865 = vmatprep.subr.mxu0 0.0
      %866 = vmatpush1.xpose.msra.mxu0 0.0
      %867 = vmatprep.subr.mxu0 0.0
      %868 = vmatpush1.xpose.msra.mxu0 0.0
      %869 = vmatprep.subr.mxu0 0.0
      %870 = vmatpush1.xpose.msra.mxu0 0.0
      %871 = vmatprep.subr.mxu0 0.0
      %872 = vmatpush1.xpose.msra.mxu0 0.0
      %873 = vmatprep.subr.mxu0 0.0
      %874 = vmatpush1.xpose.msra.mxu0 0.0
      %875 = vmatprep.subr.mxu0 0.0
      %876 = vmatpush1.xpose.msra.mxu0 0.0
      %877 = vmatprep.subr.mxu0 0.0
      %878 = vmatpush1.xpose.msra.mxu0 0.0
      %879 = vmatprep.subr.mxu0 0.0
      %880 = vmatpush1.xpose.msra.mxu0 0.0
      %881 = vmatprep.mubr.f32.mxu0 %v287
      %882 = vmatmul.mubr.f32.gmra.mrb[0].mxu0 %v286
      %v883 = vpop.f32.mrb[0].mxu0
      %v884 = vadd.f32 0.0, %v883
      %v885 = vpop.f32.mrb[0].mxu0
      %886 = vmatprep.mubr.f32.mxu0 %v289
      %887 = vmatmul.mubr.f32.gmra.mrb[0].mxu0 %v288
      %v888 = vpop.f32.mrb[0].mxu0
      %v889 = vadd.f32 0.0, %v888
      %v890 = vpop.f32.mrb[0].mxu0
      %891 = vmatprep.mubr.f32.mxu0 %v291
      %892 = vmatmul.mubr.f32.gmra.mrb[0].mxu0 %v290
      %v893 = vpop.f32.mrb[0].mxu0
      %v894 = vadd.f32 0.0, %v893
      %v895 = vpop.f32.mrb[0].mxu0
      %896 = vmatprep.mubr.f32.mxu0 %v293
      %897 = vmatmul.mubr.f32.gmra.mrb[0].mxu0 %v292
      %v898 = vpop.f32.mrb[0].mxu0
      %v899 = vadd.f32 0.0, %v898
      %v900 = vpop.f32.mrb[0].mxu0
      %901 = vdwg.mxu0
      %902 = vmatprep.subr.mxu0 %v810
      %903 = vmatpush1.xpose.msra.mxu0 %v809
      %904 = vmatprep.subr.mxu0 %v812
      %905 = vmatpush1.xpose.msra.mxu0 %v811
      %906 = vmatprep.subr.mxu0 %v814
      %907 = vmatpush1.xpose.msra.mxu0 %v813
      %908 = vmatprep.subr.mxu0 %v816
      %909 = vmatpush1.xpose.msra.mxu0 %v815
      %910 = vmatprep.subr.mxu0 0.0
      %911 = vmatpush1.xpose.msra.mxu0 0.0
      %912 = vmatprep.subr.mxu0 0.0
      %913 = vmatpush1.xpose.msra.mxu0 0.0
      %914 = vmatprep.subr.mxu0 0.0
      %915 = vmatpush1.xpose.msra.mxu0 0.0
      %916 = vmatprep.subr.mxu0 0.0
      %917 = vmatpush1.xpose.msra.mxu0 0.0
      %918 = vmatprep.subr.mxu0 0.0
      %919 = vmatpush1.xpose.msra.mxu0 0.0
      %920 = vmatprep.subr.mxu0 0.0
      %921 = vmatpush1.xpose.msra.mxu0 0.0
      %922 = vmatprep.subr.mxu0 0.0
      %923 = vmatpush1.xpose.msra.mxu0 0.0
      %924 = vmatprep.subr.mxu0 0.0
      %925 = vmatpush1.xpose.msra.mxu0 0.0
      %926 = vmatprep.subr.mxu0 0.0
      %927 = vmatpush1.xpose.msra.mxu0 0.0
      %928 = vmatprep.subr.mxu0 0.0
      %929 = vmatpush1.xpose.msra.mxu0 0.0
      %930 = vmatprep.subr.mxu0 0.0
      %931 = vmatpush1.xpose.msra.mxu0 0.0
      %932 = vmatprep.subr.mxu0 0.0
      %933 = vmatpush1.xpose.msra.mxu0 0.0
      %934 = vmatprep.subr.mxu0 0.0
      %935 = vmatpush1.xpose.msra.mxu0 0.0
      %936 = vmatprep.subr.mxu0 0.0
      %937 = vmatpush1.xpose.msra.mxu0 0.0
      %938 = vmatprep.subr.mxu0 0.0
      %939 = vmatpush1.xpose.msra.mxu0 0.0
      %940 = vmatprep.subr.mxu0 0.0
      %941 = vmatpush1.xpose.msra.mxu0 0.0
      %942 = vmatprep.subr.mxu0 0.0
      %943 = vmatpush1.xpose.msra.mxu0 0.0
      %944 = vmatprep.subr.mxu0 0.0
      %945 = vmatpush1.xpose.msra.mxu0 0.0
      %946 = vmatprep.subr.mxu0 0.0
      %947 = vmatpush1.xpose.msra.mxu0 0.0
      %948 = vmatprep.subr.mxu0 0.0
      %949 = vmatpush1.xpose.msra.mxu0 0.0
      %950 = vmatprep.subr.mxu0 0.0
      %951 = vmatpush1.xpose.msra.mxu0 0.0
      %952 = vmatprep.subr.mxu0 0.0
      %953 = vmatpush1.xpose.msra.mxu0 0.0
      %954 = vmatprep.subr.mxu0 0.0
      %955 = vmatpush1.xpose.msra.mxu0 0.0
      %956 = vmatprep.subr.mxu0 0.0
      %957 = vmatpush1.xpose.msra.mxu0 0.0
      %958 = vmatprep.subr.mxu0 0.0
      %959 = vmatpush1.xpose.msra.mxu0 0.0
      %960 = vmatprep.subr.mxu0 0.0
      %961 = vmatpush1.xpose.msra.mxu0 0.0
      %962 = vmatprep.subr.mxu0 0.0
      %963 = vmatpush1.xpose.msra.mxu0 0.0
      %964 = vmatprep.subr.mxu0 0.0
      %965 = vmatpush1.xpose.msra.mxu0 0.0
      %966 = vmatprep.mubr.f32.mxu0 %v295
      %967 = vmatmul.mubr.f32.gmra.mrb[0].mxu0 %v294
      %v968 = vpop.f32.mrb[0].mxu0
      %v969 = vadd.f32 0.0, %v968
      %v970 = vpop.f32.mrb[0].mxu0
      %971 = vmatprep.mubr.f32.mxu0 %v297
      %972 = vmatmul.mubr.f32.gmra.mrb[0].mxu0 %v296
      %v973 = vpop.f32.mrb[0].mxu0
      %v974 = vadd.f32 0.0, %v973
      %v975 = vpop.f32.mrb[0].mxu0
      %976 = vmatprep.mubr.f32.mxu0 %v299
      %977 = vmatmul.mubr.f32.gmra.mrb[0].mxu0 %v298
      %v978 = vpop.f32.mrb[0].mxu0
      %v979 = vadd.f32 0.0, %v978
      %v980 = vpop.f32.mrb[0].mxu0
      %981 = vmatprep.mubr.f32.mxu0 %v301
      %982 = vmatmul.mubr.f32.gmra.mrb[0].mxu0 %v300
      %v983 = vpop.f32.mrb[0].mxu0
      %v984 = vadd.f32 0.0, %v983
      %v985 = vpop.f32.mrb[0].mxu0
      %986 = vdwg.mxu0
      %v988 = vsel %vm342, %v884, 0
      %v991 = vsel %vm342, %v889, 0
      %v994 = vsel %vm342, %v894, 0
      %v997 = vsel %vm342, %v899, 0
      %999 = vmatprep.subr.mxu0 %v722
      %1000 = vmatpush1.msra.mxu0 %v721
      %1001 = vmatprep.subr.mxu0 %v724
      %1002 = vmatpush1.msra.mxu0 %v723
      %1003 = vmatprep.subr.mxu0 %v726
      %1004 = vmatpush1.msra.mxu0 %v725
      %1005 = vmatprep.subr.mxu0 %v728
      %1006 = vmatpush1.msra.mxu0 %v727
      %1007 = vmatprep.subr.mxu0 0.0
      %1008 = vmatpush1.msra.mxu0 0.0
      %1009 = vmatprep.subr.mxu0 0.0
      %1010 = vmatpush1.msra.mxu0 0.0
      %1011 = vmatprep.subr.mxu0 0.0
      %1012 = vmatpush1.msra.mxu0 0.0
      %1013 = vmatprep.subr.mxu0 0.0
      %1014 = vmatpush1.msra.mxu0 0.0
      %1015 = vmatprep.subr.mxu0 0.0
      %1016 = vmatpush1.msra.mxu0 0.0
      %1017 = vmatprep.subr.mxu0 0.0
      %1018 = vmatpush1.msra.mxu0 0.0
      %1019 = vmatprep.subr.mxu0 0.0
      %1020 = vmatpush1.msra.mxu0 0.0
      %1021 = vmatprep.subr.mxu0 0.0
      %1022 = vmatpush1.msra.mxu0 0.0
      %1023 = vmatprep.subr.mxu0 0.0
      %1024 = vmatpush1.msra.mxu0 0.0
      %1025 = vmatprep.subr.mxu0 0.0
      %1026 = vmatpush1.msra.mxu0 0.0
      %1027 = vmatprep.subr.mxu0 0.0
      %1028 = vmatpush1.msra.mxu0 0.0
      %1029 = vmatprep.subr.mxu0 0.0
      %1030 = vmatpush1.msra.mxu0 0.0
      %1031 = vmatprep.subr.mxu0 0.0
      %1032 = vmatpush1.msra.mxu0 0.0
      %1033 = vmatprep.subr.mxu0 0.0
      %1034 = vmatpush1.msra.mxu0 0.0
      %1035 = vmatprep.subr.mxu0 0.0
      %1036 = vmatpush1.msra.mxu0 0.0
      %1037 = vmatprep.subr.mxu0 0.0
      %1038 = vmatpush1.msra.mxu0 0.0
      %1039 = vmatprep.subr.mxu0 0.0
      %1040 = vmatpush1.msra.mxu0 0.0
      %1041 = vmatprep.subr.mxu0 0.0
      %1042 = vmatpush1.msra.mxu0 0.0
      %1043 = vmatprep.subr.mxu0 0.0
      %1044 = vmatpush1.msra.mxu0 0.0
      %1045 = vmatprep.subr.mxu0 0.0
      %1046 = vmatpush1.msra.mxu0 0.0
      %1047 = vmatprep.subr.mxu0 0.0
      %1048 = vmatpush1.msra.mxu0 0.0
      %1049 = vmatprep.subr.mxu0 0.0
      %1050 = vmatpush1.msra.mxu0 0.0
      %1051 = vmatprep.subr.mxu0 0.0
      %1052 = vmatpush1.msra.mxu0 0.0
      %1053 = vmatprep.subr.mxu0 0.0
      %1054 = vmatpush1.msra.mxu0 0.0
      %1055 = vmatprep.subr.mxu0 0.0
      %1056 = vmatpush1.msra.mxu0 0.0
      %1057 = vmatprep.subr.mxu0 0.0
      %1058 = vmatpush1.msra.mxu0 0.0
      %1059 = vmatprep.subr.mxu0 0.0
      %1060 = vmatpush1.msra.mxu0 0.0
      %1061 = vmatprep.subr.mxu0 0.0
      %1062 = vmatpush1.msra.mxu0 0.0
      %1063 = vmatprep.mubr.f32.mxu0 0.0
      %1064 = vmatmul.mubr.f32.gmra.mrb[0].mxu0 %v988
      %v1065 = vpop.f32.mrb[0].mxu0
      %v1066 = vadd.f32 0.0, %v1065
      %v1067 = vpop.f32.mrb[0].mxu0
      %v1068 = vadd.f32 0.0, %v1067
      %1069 = vmatprep.mubr.f32.mxu0 0.0
      %1070 = vmatmul.mubr.f32.gmra.mrb[0].mxu0 %v991
      %v1071 = vpop.f32.mrb[0].mxu0
      %v1072 = vadd.f32 0.0, %v1071
      %v1073 = vpop.f32.mrb[0].mxu0
      %v1074 = vadd.f32 0.0, %v1073
      %1075 = vmatprep.mubr.f32.mxu0 0.0
      %1076 = vmatmul.mubr.f32.gmra.mrb[0].mxu0 %v994
      %v1077 = vpop.f32.mrb[0].mxu0
      %v1078 = vadd.f32 0.0, %v1077
      %v1079 = vpop.f32.mrb[0].mxu0
      %v1080 = vadd.f32 0.0, %v1079
      %1081 = vmatprep.mubr.f32.mxu0 0.0
      %1082 = vmatmul.mubr.f32.gmra.mrb[0].mxu0 %v997
      %v1083 = vpop.f32.mrb[0].mxu0
      %v1084 = vadd.f32 0.0, %v1083
      %v1085 = vpop.f32.mrb[0].mxu0
      %v1086 = vadd.f32 0.0, %v1085
      %1087 = vdwg.mxu0
      %v1089 = vsel %vm342, %v969, 0
      %v1092 = vsel %vm342, %v974, 0
      %v1095 = vsel %vm342, %v979, 0
      %v1098 = vsel %vm342, %v984, 0
      %1100 = vmatprep.subr.mxu0 %v730
      %1101 = vmatpush1.msra.mxu0 %v729
      %1102 = vmatprep.subr.mxu0 %v732
      %1103 = vmatpush1.msra.mxu0 %v731
      %1104 = vmatprep.subr.mxu0 %v734
      %1105 = vmatpush1.msra.mxu0 %v733
      %1106 = vmatprep.subr.mxu0 %v736
      %1107 = vmatpush1.msra.mxu0 %v735
      %1108 = vmatprep.subr.mxu0 0.0
      %1109 = vmatpush1.msra.mxu0 0.0
      %1110 = vmatprep.subr.mxu0 0.0
      %1111 = vmatpush1.msra.mxu0 0.0
      %1112 = vmatprep.subr.mxu0 0.0
      %1113 = vmatpush1.msra.mxu0 0.0
      %1114 = vmatprep.subr.mxu0 0.0
      %1115 = vmatpush1.msra.mxu0 0.0
      %1116 = vmatprep.subr.mxu0 0.0
      %1117 = vmatpush1.msra.mxu0 0.0
      %1118 = vmatprep.subr.mxu0 0.0
      %1119 = vmatpush1.msra.mxu0 0.0
      %1120 = vmatprep.subr.mxu0 0.0
      %1121 = vmatpush1.msra.mxu0 0.0
      %1122 = vmatprep.subr.mxu0 0.0
      %1123 = vmatpush1.msra.mxu0 0.0
      %1124 = vmatprep.subr.mxu0 0.0
      %1125 = vmatpush1.msra.mxu0 0.0
      %1126 = vmatprep.subr.mxu0 0.0
      %1127 = vmatpush1.msra.mxu0 0.0
      %1128 = vmatprep.subr.mxu0 0.0
      %1129 = vmatpush1.msra.mxu0 0.0
      %1130 = vmatprep.subr.mxu0 0.0
      %1131 = vmatpush1.msra.mxu0 0.0
      %1132 = vmatprep.subr.mxu0 0.0
      %1133 = vmatpush1.msra.mxu0 0.0
      %1134 = vmatprep.subr.mxu0 0.0
      %1135 = vmatpush1.msra.mxu0 0.0
      %1136 = vmatprep.subr.mxu0 0.0
      %1137 = vmatpush1.msra.mxu0 0.0
      %1138 = vmatprep.subr.mxu0 0.0
      %1139 = vmatpush1.msra.mxu0 0.0
      %1140 = vmatprep.subr.mxu0 0.0
      %1141 = vmatpush1.msra.mxu0 0.0
      %1142 = vmatprep.subr.mxu0 0.0
      %1143 = vmatpush1.msra.mxu0 0.0
      %1144 = vmatprep.subr.mxu0 0.0
      %1145 = vmatpush1.msra.mxu0 0.0
      %1146 = vmatprep.subr.mxu0 0.0
      %1147 = vmatpush1.msra.mxu0 0.0
      %1148 = vmatprep.subr.mxu0 0.0
      %1149 = vmatpush1.msra.mxu0 0.0
      %1150 = vmatprep.subr.mxu0 0.0
      %1151 = vmatpush1.msra.mxu0 0.0
      %1152 = vmatprep.subr.mxu0 0.0
      %1153 = vmatpush1.msra.mxu0 0.0
      %1154 = vmatprep.subr.mxu0 0.0
      %1155 = vmatpush1.msra.mxu0 0.0
      %1156 = vmatprep.subr.mxu0 0.0
      %1157 = vmatpush1.msra.mxu0 0.0
      %1158 = vmatprep.subr.mxu0 0.0
      %1159 = vmatpush1.msra.mxu0 0.0
      %1160 = vmatprep.subr.mxu0 0.0
      %1161 = vmatpush1.msra.mxu0 0.0
      %1162 = vmatprep.subr.mxu0 0.0
      %1163 = vmatpush1.msra.mxu0 0.0
      %1164 = vmatprep.mubr.f32.mxu0 0.0
      %1165 = vmatmul.mubr.f32.gmra.mrb[0].mxu0 %v1089
      %v1166 = vpop.f32.mrb[0].mxu0
      %v1167 = vadd.f32 0.0, %v1166
      %v1168 = vpop.f32.mrb[0].mxu0
      %v1169 = vadd.f32 0.0, %v1168
      %1170 = vmatprep.mubr.f32.mxu0 0.0
      %1171 = vmatmul.mubr.f32.gmra.mrb[0].mxu0 %v1092
      %v1172 = vpop.f32.mrb[0].mxu0
      %v1173 = vadd.f32 0.0, %v1172
      %v1174 = vpop.f32.mrb[0].mxu0
      %v1175 = vadd.f32 0.0, %v1174
      %1176 = vmatprep.mubr.f32.mxu0 0.0
      %1177 = vmatmul.mubr.f32.gmra.mrb[0].mxu0 %v1095
      %v1178 = vpop.f32.mrb[0].mxu0
      %v1179 = vadd.f32 0.0, %v1178
      %v1180 = vpop.f32.mrb[0].mxu0
      %v1181 = vadd.f32 0.0, %v1180
      %1182 = vmatprep.mubr.f32.mxu0 0.0
      %1183 = vmatmul.mubr.f32.gmra.mrb[0].mxu0 %v1098
      %v1184 = vpop.f32.mrb[0].mxu0
      %v1185 = vadd.f32 0.0, %v1184
      %v1186 = vpop.f32.mrb[0].mxu0
      %v1187 = vadd.f32 0.0, %v1186
      %1188 = vdwg.mxu0
      %v1189 = vadd.f32 %v801, %v802
      %1190 = vadd.xlane.f32.xlu0 %v1189
      %v1191 = vpop.xlane.xlu0 %1190
      %v1192 = vadd.f32 %v803, %v804
      %1193 = vadd.xlane.f32.xlu0 %v1192
      %v1194 = vpop.xlane.xlu0 %1193
      %v1195 = vadd.f32 %v805, %v806
      %1196 = vadd.xlane.f32.xlu0 %v1195
      %v1197 = vpop.xlane.xlu0 %1196
      %v1198 = vadd.f32 %v807, %v808
      %1199 = vadd.xlane.f32.xlu0 %v1198
      %v1200 = vpop.xlane.xlu0 %1199
      %v1201 = vadd.f32 %v809, %v810
      %1202 = vadd.xlane.f32.xlu0 %v1201
      %v1203 = vpop.xlane.xlu0 %1202
      %v1204 = vadd.f32 %v811, %v812
      %1205 = vadd.xlane.f32.xlu0 %v1204
      %v1206 = vpop.xlane.xlu0 %1205
      %v1207 = vadd.f32 %v813, %v814
      %1208 = vadd.xlane.f32.xlu0 %v1207
      %v1209 = vpop.xlane.xlu0 %1208
      %v1210 = vadd.f32 %v815, %v816
      %1211 = vadd.xlane.f32.xlu0 %v1210
      %v1212 = vpop.xlane.xlu0 %1211
      %v1213 = vmul.f32 %v721, %v1191
      %v1214 = vmul.f32 %v722, %v1191
      %v1215 = vmul.f32 %v723, %v1194
      %v1216 = vmul.f32 %v724, %v1194
      %v1217 = vmul.f32 %v725, %v1197
      %v1218 = vmul.f32 %v726, %v1197
      %v1219 = vmul.f32 %v727, %v1200
      %v1220 = vmul.f32 %v728, %v1200
      %v1221 = vmul.f32 %v729, %v1203
      %v1222 = vmul.f32 %v730, %v1203
      %v1223 = vmul.f32 %v731, %v1206
      %v1224 = vmul.f32 %v732, %v1206
      %v1225 = vmul.f32 %v733, %v1209
      %v1226 = vmul.f32 %v734, %v1209
      %v1227 = vmul.f32 %v735, %v1212
      %v1228 = vmul.f32 %v736, %v1212
      %v1229 = vadd.f32 %v1213, %v1215
      %v1230 = vadd.f32 %v1229, %v1217
      %v1231 = vadd.f32 %v1230, %v1219
      %v1232 = vrot.slane %v1231, 4
      %v1233 = vadd.f32 %v1231, %v1232
      %v1234 = vrot.slane %v1233, 2
      %v1235 = vadd.f32 %v1233, %v1234
      %v1236 = vrot.slane %v1235, 1
      %v1237 = vadd.f32 %v1235, %v1236
      %v1238 = vadd.f32 %v1214, %v1216
      %v1239 = vadd.f32 %v1238, %v1218
      %v1240 = vadd.f32 %v1239, %v1220
      %v1241 = vrot.slane %v1240, 4
      %v1242 = vadd.f32 %v1240, %v1241
      %v1243 = vrot.slane %v1242, 2
      %v1244 = vadd.f32 %v1242, %v1243
      %v1245 = vrot.slane %v1244, 1
      %v1246 = vadd.f32 %v1244, %v1245
      %v1247 = vadd.f32 %v1221, %v1223
      %v1248 = vadd.f32 %v1247, %v1225
      %v1249 = vadd.f32 %v1248, %v1227
      %v1250 = vrot.slane %v1249, 4
      %v1251 = vadd.f32 %v1249, %v1250
      %v1252 = vrot.slane %v1251, 2
      %v1253 = vadd.f32 %v1251, %v1252
      %v1254 = vrot.slane %v1253, 1
      %v1255 = vadd.f32 %v1253, %v1254
      %v1256 = vadd.f32 %v1222, %v1224
      %v1257 = vadd.f32 %v1256, %v1226
      %v1258 = vadd.f32 %v1257, %v1228
      %v1259 = vrot.slane %v1258, 4
      %v1260 = vadd.f32 %v1258, %v1259
      %v1261 = vrot.slane %v1260, 2
      %v1262 = vadd.f32 %v1260, %v1261
      %v1263 = vrot.slane %v1262, 1
      %v1264 = vadd.f32 %v1262, %v1263
      %v1265 = vmul.f32 %v1237, 0.00390625
      %v1266 = vmul.f32 %v1246, 0.00390625
      %v1267 = vmul.f32 %v1255, 0.00390625
      %v1268 = vmul.f32 %v1264, 0.00390625
      %v1269 = vadd.f32 %v1265, 1e-06
      %v1270 = vadd.f32 %v1266, 1e-06
      %v1271 = vadd.f32 %v1267, 1e-06
      %v1272 = vadd.f32 %v1268, 1e-06
      %v1273 = vrcp.pop %v1269
      %v1274 = vmul.f32 0.00390625, %v1273
      %v1275 = vrcp.pop %v1270
      %v1276 = vmul.f32 0.00390625, %v1275
      %v1277 = vrcp.pop %v1271
      %v1278 = vmul.f32 0.00390625, %v1277
      %v1279 = vrcp.pop %v1272
      %v1280 = vmul.f32 0.00390625, %v1279
      %v1281 = vmul.f32 %v1066, %v1274
      %v1282 = vmul.f32 %v1068, %v1276
      %v1283 = vmul.f32 %v1072, %v1274
      %v1284 = vmul.f32 %v1074, %v1276
      %v1285 = vmul.f32 %v1078, %v1274
      %v1286 = vmul.f32 %v1080, %v1276
      %v1287 = vmul.f32 %v1084, %v1274
      %v1288 = vmul.f32 %v1086, %v1276
      %v1289 = vmul.f32 %v1167, %v1278
      %v1290 = vmul.f32 %v1169, %v1280
      %v1291 = vmul.f32 %v1173, %v1278
      %v1292 = vmul.f32 %v1175, %v1280
      %v1293 = vmul.f32 %v1179, %v1278
      %v1294 = vmul.f32 %v1181, %v1280
      %v1295 = vmul.f32 %v1185, %v1278
      %v1296 = vmul.f32 %v1187, %v1280
      %s1297 = scalar_lea.vmem %s3, 256
      %v1298 = vld [vmem:[%s1297] sm:$0xff]
      %v1299 = vld [vmem:[%s1297 + $0x8] sm:$0xff]
      %v1300 = vld [vmem:[%s1297 + $0x10] sm:$0xff]
      %v1301 = vld [vmem:[%s1297 + $0x18] sm:$0xff]
      %v1302 = vld [vmem:[%s1297 + $0x20] sm:$0xff]
      %v1303 = vld [vmem:[%s1297 + $0x28] sm:$0xff]
      %v1304 = vld [vmem:[%s1297 + $0x30] sm:$0xff]
      %v1305 = vld [vmem:[%s1297 + $0x38] sm:$0xff]
      %1307 = vset.pattern.permute.xlu0 0
      %1308 = vperm.xlu0 %1307, %v1298
      %v1309 = vpop.permute.xlu0 %1308
      %1312 = vset.pattern.permute.xlu0 0
      %1313 = vperm.xlu0 %1312, %v1299
      %v1314 = vpop.permute.xlu0 %1313
      %1317 = vset.pattern.permute.xlu0 0
      %1318 = vperm.xlu0 %1317, %v1300
      %v1319 = vpop.permute.xlu0 %1318
      %1322 = vset.pattern.permute.xlu0 0
      %1323 = vperm.xlu0 %1322, %v1301
      %v1324 = vpop.permute.xlu0 %1323
      %1327 = vset.pattern.permute.xlu0 0
      %1328 = vperm.xlu0 %1327, %v1302
      %v1329 = vpop.permute.xlu0 %1328
      %1332 = vset.pattern.permute.xlu0 0
      %1333 = vperm.xlu0 %1332, %v1303
      %v1334 = vpop.permute.xlu0 %1333
      %1337 = vset.pattern.permute.xlu0 0
      %1338 = vperm.xlu0 %1337, %v1304
      %v1339 = vpop.permute.xlu0 %1338
      %1342 = vset.pattern.permute.xlu0 0
      %1343 = vperm.xlu0 %1342, %v1305
      %v1344 = vpop.permute.xlu0 %1343
      %v1346 = vmul.f32 %v286, %v1309
      %v1347 = vmul.f32 %v287, %v1309
      %v1348 = vmul.f32 %v288, %v1314
      %v1349 = vmul.f32 %v289, %v1314
      %v1350 = vmul.f32 %v290, %v1319
      %v1351 = vmul.f32 %v291, %v1319
      %v1352 = vmul.f32 %v292, %v1324
      %v1353 = vmul.f32 %v293, %v1324
      %v1354 = vmul.f32 %v294, %v1329
      %v1355 = vmul.f32 %v295, %v1329
      %v1356 = vmul.f32 %v296, %v1334
      %v1357 = vmul.f32 %v297, %v1334
      %v1358 = vmul.f32 %v298, %v1339
      %v1359 = vmul.f32 %v299, %v1339
      %v1360 = vmul.f32 %v300, %v1344
      %v1361 = vmul.f32 %v301, %v1344
      %v1362 = vld [vmem:[%s4] sm:$0xff]
      %v1363 = vld [vmem:[%s4 + $0x8] sm:$0xff]
      %v1364 = vld [vmem:[%s4 + $0x10] sm:$0xff]
      %v1365 = vld [vmem:[%s4 + $0x18] sm:$0xff]
      %v1366 = vld [vmem:[%s4 + $0x20] sm:$0xff]
      %v1367 = vld [vmem:[%s4 + $0x28] sm:$0xff]
      %v1368 = vld [vmem:[%s4 + $0x30] sm:$0xff]
      %v1369 = vld [vmem:[%s4 + $0x38] sm:$0xff]
      %1371 = vset.pattern.permute.xlu0 0
      %1372 = vperm.xlu0 %1371, %v1362
      %v1373 = vpop.permute.xlu0 %1372
      %1376 = vset.pattern.permute.xlu0 0
      %1377 = vperm.xlu0 %1376, %v1363
      %v1378 = vpop.permute.xlu0 %1377
      %1381 = vset.pattern.permute.xlu0 0
      %1382 = vperm.xlu0 %1381, %v1364
      %v1383 = vpop.permute.xlu0 %1382
      %1386 = vset.pattern.permute.xlu0 0
      %1387 = vperm.xlu0 %1386, %v1365
      %v1388 = vpop.permute.xlu0 %1387
      %1391 = vset.pattern.permute.xlu0 0
      %1392 = vperm.xlu0 %1391, %v1366
      %v1393 = vpop.permute.xlu0 %1392
      %1396 = vset.pattern.permute.xlu0 0
      %1397 = vperm.xlu0 %1396, %v1367
      %v1398 = vpop.permute.xlu0 %1397
      %1401 = vset.pattern.permute.xlu0 0
      %1402 = vperm.xlu0 %1401, %v1368
      %v1403 = vpop.permute.xlu0 %1402
      %1406 = vset.pattern.permute.xlu0 0
      %1407 = vperm.xlu0 %1406, %v1369
      %v1408 = vpop.permute.xlu0 %1407
      %v1410 = vadd.f32 %v1346, %v1373
      %v1411 = vadd.f32 %v1347, %v1373
      %v1412 = vadd.f32 %v1348, %v1378
      %v1413 = vadd.f32 %v1349, %v1378
      %v1414 = vadd.f32 %v1350, %v1383
      %v1415 = vadd.f32 %v1351, %v1383
      %v1416 = vadd.f32 %v1352, %v1388
      %v1417 = vadd.f32 %v1353, %v1388
      %v1418 = vadd.f32 %v1354, %v1393
      %v1419 = vadd.f32 %v1355, %v1393
      %v1420 = vadd.f32 %v1356, %v1398
      %v1421 = vadd.f32 %v1357, %v1398
      %v1422 = vadd.f32 %v1358, %v1403
      %v1423 = vadd.f32 %v1359, %v1403
      %v1424 = vadd.f32 %v1360, %v1408
      %v1425 = vadd.f32 %v1361, %v1408
      %1426 = vrot.lane.b32.xlu0 %v286, 17
      %v1427 = vpop.permute.xlu0 %1426
      %1428 = vrot.lane.b32.xlu0 %v288, 17
      %v1429 = vpop.permute.xlu0 %1428
      %1430 = vrot.lane.b32.xlu0 %v290, 17
      %v1431 = vpop.permute.xlu0 %1430
      %1432 = vrot.lane.b32.xlu0 %v292, 17
      %v1433 = vpop.permute.xlu0 %1432
      %1434 = vrot.lane.b32.xlu0 %v294, 17
      %v1435 = vpop.permute.xlu0 %1434
      %1436 = vrot.lane.b32.xlu0 %v296, 17
      %v1437 = vpop.permute.xlu0 %1436
      %1438 = vrot.lane.b32.xlu0 %v298, 17
      %v1439 = vpop.permute.xlu0 %1438
      %1440 = vrot.lane.b32.xlu0 %v300, 17
      %v1441 = vpop.permute.xlu0 %1440
      %1442 = vrot.lane.b32.xlu0 %v287, 17
      %v1443 = vpop.permute.xlu0 %1442
      %1444 = vrot.lane.b32.xlu0 %v289, 17
      %v1445 = vpop.permute.xlu0 %1444
      %1446 = vrot.lane.b32.xlu0 %v291, 17
      %v1447 = vpop.permute.xlu0 %1446
      %1448 = vrot.lane.b32.xlu0 %v293, 17
      %v1449 = vpop.permute.xlu0 %1448
      %1450 = vrot.lane.b32.xlu0 %v295, 17
      %v1451 = vpop.permute.xlu0 %1450
      %1452 = vrot.lane.b32.xlu0 %v297, 17
      %v1453 = vpop.permute.xlu0 %1452
      %1454 = vrot.lane.b32.xlu0 %v299, 17
      %v1455 = vpop.permute.xlu0 %1454
      %1456 = vrot.lane.b32.xlu0 %v301, 17
      %v1457 = vpop.permute.xlu0 %1456
      %v1458 = vlaneseq
      %v1459 = vand.u32 %v1458, 127
      %vm1460 = vcmp.lt.s32.totalorder %v1459, 17
      %v1461 = vsel %vm1460, %v1427, %v1443
      %v1462 = vsel %vm1460, %v1429, %v1445
      %v1463 = vsel %vm1460, %v1431, %v1447
      %v1464 = vsel %vm1460, %v1433, %v1449
      %v1465 = vsel %vm1460, %v1435, %v1451
      %v1466 = vsel %vm1460, %v1437, %v1453
      %v1467 = vsel %vm1460, %v1439, %v1455
      %v1468 = vsel %vm1460, %v1441, %v1457
      %v1469 = vsel %vm1460, %v1443, %v1427
      %v1470 = vsel %vm1460, %v1445, %v1429
      %v1471 = vsel %vm1460, %v1447, %v1431
      %v1472 = vsel %vm1460, %v1449, %v1433
      %v1473 = vsel %vm1460, %v1451, %v1435
      %v1474 = vsel %vm1460, %v1453, %v1437
      %v1475 = vsel %vm1460, %v1455, %v1439
      %v1476 = vsel %vm1460, %v1457, %v1441
      %v1477 = vld [vmem:[%s5] sm:$0x3]
      %v1479 = vlaneseq
      %v1480 = vshrl.u32 %v1479, 7
      %v1481 = vsub.s32 0, %v1480
      %v1482 = vrot.slane %v1477, %v1481
      %v1483 = vlaneseq
      %v1484 = vshrl.u32 %v1483, 7
      %v1485 = vsub.s32 1, %v1484
      %v1486 = vrot.slane %v1477, %v1485
      %v1489 = vmul.f32 %v1469, %v1482
      %v1490 = vmul.f32 %v1461, %v1486
      %v1491 = vmul.f32 %v1470, %v1482
      %v1492 = vmul.f32 %v1462, %v1486
      %v1493 = vmul.f32 %v1471, %v1482
      %v1494 = vmul.f32 %v1463, %v1486
      %v1495 = vmul.f32 %v1472, %v1482
      %v1496 = vmul.f32 %v1464, %v1486
      %v1497 = vmul.f32 %v1473, %v1482
      %v1498 = vmul.f32 %v1465, %v1486
      %v1499 = vmul.f32 %v1474, %v1482
      %v1500 = vmul.f32 %v1466, %v1486
      %v1501 = vmul.f32 %v1475, %v1482
      %v1502 = vmul.f32 %v1467, %v1486
      %v1503 = vmul.f32 %v1476, %v1482
      %v1504 = vmul.f32 %v1468, %v1486
      %v1505 = vld [vmem:[%s3] sm:$0xff]
      %v1506 = vld [vmem:[%s3 + $0x8] sm:$0xff]
      %v1507 = vld [vmem:[%s3 + $0x10] sm:$0xff]
      %v1508 = vld [vmem:[%s3 + $0x18] sm:$0xff]
      %v1509 = vld [vmem:[%s3 + $0x20] sm:$0xff]
      %v1510 = vld [vmem:[%s3 + $0x28] sm:$0xff]
      %v1511 = vld [vmem:[%s3 + $0x30] sm:$0xff]
      %v1512 = vld [vmem:[%s3 + $0x38] sm:$0xff]
      %1514 = vset.pattern.permute.xlu0 0
      %1515 = vperm.xlu0 %1514, %v1505
      %v1516 = vpop.permute.xlu0 %1515
      %1519 = vset.pattern.permute.xlu0 0
      %1520 = vperm.xlu0 %1519, %v1506
      %v1521 = vpop.permute.xlu0 %1520
      %1524 = vset.pattern.permute.xlu0 0
      %1525 = vperm.xlu0 %1524, %v1507
      %v1526 = vpop.permute.xlu0 %1525
      %1529 = vset.pattern.permute.xlu0 0
      %1530 = vperm.xlu0 %1529, %v1508
      %v1531 = vpop.permute.xlu0 %1530
      %1534 = vset.pattern.permute.xlu0 0
      %1535 = vperm.xlu0 %1534, %v1509
      %v1536 = vpop.permute.xlu0 %1535
      %1539 = vset.pattern.permute.xlu0 0
      %1540 = vperm.xlu0 %1539, %v1510
      %v1541 = vpop.permute.xlu0 %1540
      %1544 = vset.pattern.permute.xlu0 0
      %1545 = vperm.xlu0 %1544, %v1511
      %v1546 = vpop.permute.xlu0 %1545
      %1549 = vset.pattern.permute.xlu0 0
      %1550 = vperm.xlu0 %1549, %v1512
      %v1551 = vpop.permute.xlu0 %1550
      %v1553 = vmul.f32 %v1489, %v1516
      %v1554 = vmul.f32 %v1490, %v1516
      %v1555 = vmul.f32 %v1491, %v1521
      %v1556 = vmul.f32 %v1492, %v1521
      %v1557 = vmul.f32 %v1493, %v1526
      %v1558 = vmul.f32 %v1494, %v1526
      %v1559 = vmul.f32 %v1495, %v1531
      %v1560 = vmul.f32 %v1496, %v1531
      %v1561 = vmul.f32 %v1497, %v1536
      %v1562 = vmul.f32 %v1498, %v1536
      %v1563 = vmul.f32 %v1499, %v1541
      %v1564 = vmul.f32 %v1500, %v1541
      %v1565 = vmul.f32 %v1501, %v1546
      %v1566 = vmul.f32 %v1502, %v1546
      %v1567 = vmul.f32 %v1503, %v1551
      %v1568 = vmul.f32 %v1504, %v1551
      %v1569 = vadd.f32 %v1410, %v1553
      %v1570 = vadd.f32 %v1411, %v1554
      %v1571 = vadd.f32 %v1412, %v1555
      %v1572 = vadd.f32 %v1413, %v1556
      %v1573 = vadd.f32 %v1414, %v1557
      %v1574 = vadd.f32 %v1415, %v1558
      %v1575 = vadd.f32 %v1416, %v1559
      %v1576 = vadd.f32 %v1417, %v1560
      %v1577 = vadd.f32 %v1418, %v1561
      %v1578 = vadd.f32 %v1419, %v1562
      %v1579 = vadd.f32 %v1420, %v1563
      %v1580 = vadd.f32 %v1421, %v1564
      %v1581 = vadd.f32 %v1422, %v1565
      %v1582 = vadd.f32 %v1423, %v1566
      %v1583 = vadd.f32 %v1424, %v1567
      %v1584 = vadd.f32 %v1425, %v1568
      %1585 = vrot.lane.b32.xlu0 %v286, 16
      %v1586 = vpop.permute.xlu0 %1585
      %1587 = vrot.lane.b32.xlu0 %v288, 16
      %v1588 = vpop.permute.xlu0 %1587
      %1589 = vrot.lane.b32.xlu0 %v290, 16
      %v1590 = vpop.permute.xlu0 %1589
      %1591 = vrot.lane.b32.xlu0 %v292, 16
      %v1592 = vpop.permute.xlu0 %1591
      %1593 = vrot.lane.b32.xlu0 %v294, 16
      %v1594 = vpop.permute.xlu0 %1593
      %1595 = vrot.lane.b32.xlu0 %v296, 16
      %v1596 = vpop.permute.xlu0 %1595
      %1597 = vrot.lane.b32.xlu0 %v298, 16
      %v1598 = vpop.permute.xlu0 %1597
      %1599 = vrot.lane.b32.xlu0 %v300, 16
      %v1600 = vpop.permute.xlu0 %1599
      %1601 = vrot.lane.b32.xlu0 %v287, 16
      %v1602 = vpop.permute.xlu0 %1601
      %1603 = vrot.lane.b32.xlu0 %v289, 16
      %v1604 = vpop.permute.xlu0 %1603
      %1605 = vrot.lane.b32.xlu0 %v291, 16
      %v1606 = vpop.permute.xlu0 %1605
      %1607 = vrot.lane.b32.xlu0 %v293, 16
      %v1608 = vpop.permute.xlu0 %1607
      %1609 = vrot.lane.b32.xlu0 %v295, 16
      %v1610 = vpop.permute.xlu0 %1609
      %1611 = vrot.lane.b32.xlu0 %v297, 16
      %v1612 = vpop.permute.xlu0 %1611
      %1613 = vrot.lane.b32.xlu0 %v299, 16
      %v1614 = vpop.permute.xlu0 %1613
      %1615 = vrot.lane.b32.xlu0 %v301, 16
      %v1616 = vpop.permute.xlu0 %1615
      %vm1617 = vcmp.lt.s32.totalorder %v1459, 16
      %v1618 = vsel %vm1617, %v1586, %v1602
      %v1619 = vsel %vm1617, %v1588, %v1604
      %v1620 = vsel %vm1617, %v1590, %v1606
      %v1621 = vsel %vm1617, %v1592, %v1608
      %v1622 = vsel %vm1617, %v1594, %v1610
      %v1623 = vsel %vm1617, %v1596, %v1612
      %v1624 = vsel %vm1617, %v1598, %v1614
      %v1625 = vsel %vm1617, %v1600, %v1616
      %v1626 = vsel %vm1617, %v1602, %v1586
      %v1627 = vsel %vm1617, %v1604, %v1588
      %v1628 = vsel %vm1617, %v1606, %v1590
      %v1629 = vsel %vm1617, %v1608, %v1592
      %v1630 = vsel %vm1617, %v1610, %v1594
      %v1631 = vsel %vm1617, %v1612, %v1596
      %v1632 = vsel %vm1617, %v1614, %v1598
      %v1633 = vsel %vm1617, %v1616, %v1600
      %s1634 = scalar_lea.vmem %s5, 2
      %v1635 = vld [vmem:[%s1634] sm:$0x3]
      %v1637 = vlaneseq
      %v1638 = vshrl.u32 %v1637, 7
      %v1639 = vsub.s32 0, %v1638
      %v1640 = vrot.slane %v1635, %v1639
      %v1641 = vlaneseq
      %v1642 = vshrl.u32 %v1641, 7
      %v1643 = vsub.s32 1, %v1642
      %v1644 = vrot.slane %v1635, %v1643
      %v1647 = vmul.f32 %v1626, %v1640
      %v1648 = vmul.f32 %v1618, %v1644
      %v1649 = vmul.f32 %v1627, %v1640
      %v1650 = vmul.f32 %v1619, %v1644
      %v1651 = vmul.f32 %v1628, %v1640
      %v1652 = vmul.f32 %v1620, %v1644
      %v1653 = vmul.f32 %v1629, %v1640
      %v1654 = vmul.f32 %v1621, %v1644
      %v1655 = vmul.f32 %v1630, %v1640
      %v1656 = vmul.f32 %v1622, %v1644
      %v1657 = vmul.f32 %v1631, %v1640
      %v1658 = vmul.f32 %v1623, %v1644
      %v1659 = vmul.f32 %v1632, %v1640
      %v1660 = vmul.f32 %v1624, %v1644
      %v1661 = vmul.f32 %v1633, %v1640
      %v1662 = vmul.f32 %v1625, %v1644
      %s1663 = scalar_lea.vmem %s3, 64
      %v1664 = vld [vmem:[%s1663] sm:$0xff]
      %v1665 = vld [vmem:[%s1663 + $0x8] sm:$0xff]
      %v1666 = vld [vmem:[%s1663 + $0x10] sm:$0xff]
      %v1667 = vld [vmem:[%s1663 + $0x18] sm:$0xff]
      %v1668 = vld [vmem:[%s1663 + $0x20] sm:$0xff]
      %v1669 = vld [vmem:[%s1663 + $0x28] sm:$0xff]
      %v1670 = vld [vmem:[%s1663 + $0x30] sm:$0xff]
      %v1671 = vld [vmem:[%s1663 + $0x38] sm:$0xff]
      %1673 = vset.pattern.permute.xlu0 0
      %1674 = vperm.xlu0 %1673, %v1664
      %v1675 = vpop.permute.xlu0 %1674
      %1678 = vset.pattern.permute.xlu0 0
      %1679 = vperm.xlu0 %1678, %v1665
      %v1680 = vpop.permute.xlu0 %1679
      %1683 = vset.pattern.permute.xlu0 0
      %1684 = vperm.xlu0 %1683, %v1666
      %v1685 = vpop.permute.xlu0 %1684
      %1688 = vset.pattern.permute.xlu0 0
      %1689 = vperm.xlu0 %1688, %v1667
      %v1690 = vpop.permute.xlu0 %1689
      %1693 = vset.pattern.permute.xlu0 0
      %1694 = vperm.xlu0 %1693, %v1668
      %v1695 = vpop.permute.xlu0 %1694
      %1698 = vset.pattern.permute.xlu0 0
      %1699 = vperm.xlu0 %1698, %v1669
      %v1700 = vpop.permute.xlu0 %1699
      %1703 = vset.pattern.permute.xlu0 0
      %1704 = vperm.xlu0 %1703, %v1670
      %v1705 = vpop.permute.xlu0 %1704
      %1708 = vset.pattern.permute.xlu0 0
      %1709 = vperm.xlu0 %1708, %v1671
      %v1710 = vpop.permute.xlu0 %1709
      %v1712 = vmul.f32 %v1647, %v1675
      %v1713 = vmul.f32 %v1648, %v1675
      %v1714 = vmul.f32 %v1649, %v1680
      %v1715 = vmul.f32 %v1650, %v1680
      %v1716 = vmul.f32 %v1651, %v1685
      %v1717 = vmul.f32 %v1652, %v1685
      %v1718 = vmul.f32 %v1653, %v1690
      %v1719 = vmul.f32 %v1654, %v1690
      %v1720 = vmul.f32 %v1655, %v1695
      %v1721 = vmul.f32 %v1656, %v1695
      %v1722 = vmul.f32 %v1657, %v1700
      %v1723 = vmul.f32 %v1658, %v1700
      %v1724 = vmul.f32 %v1659, %v1705
      %v1725 = vmul.f32 %v1660, %v1705
      %v1726 = vmul.f32 %v1661, %v1710
      %v1727 = vmul.f32 %v1662, %v1710
      %v1728 = vadd.f32 %v1569, %v1712
      %v1729 = vadd.f32 %v1570, %v1713
      %v1730 = vadd.f32 %v1571, %v1714
      %v1731 = vadd.f32 %v1572, %v1715
      %v1732 = vadd.f32 %v1573, %v1716
      %v1733 = vadd.f32 %v1574, %v1717
      %v1734 = vadd.f32 %v1575, %v1718
      %v1735 = vadd.f32 %v1576, %v1719
      %v1736 = vadd.f32 %v1577, %v1720
      %v1737 = vadd.f32 %v1578, %v1721
      %v1738 = vadd.f32 %v1579, %v1722
      %v1739 = vadd.f32 %v1580, %v1723
      %v1740 = vadd.f32 %v1581, %v1724
      %v1741 = vadd.f32 %v1582, %v1725
      %v1742 = vadd.f32 %v1583, %v1726
      %v1743 = vadd.f32 %v1584, %v1727
      %1744 = vrot.lane.b32.xlu0 %v286, 15
      %v1745 = vpop.permute.xlu0 %1744
      %1746 = vrot.lane.b32.xlu0 %v288, 15
      %v1747 = vpop.permute.xlu0 %1746
      %1748 = vrot.lane.b32.xlu0 %v290, 15
      %v1749 = vpop.permute.xlu0 %1748
      %1750 = vrot.lane.b32.xlu0 %v292, 15
      %v1751 = vpop.permute.xlu0 %1750
      %1752 = vrot.lane.b32.xlu0 %v294, 15
      %v1753 = vpop.permute.xlu0 %1752
      %1754 = vrot.lane.b32.xlu0 %v296, 15
      %v1755 = vpop.permute.xlu0 %1754
      %1756 = vrot.lane.b32.xlu0 %v298, 15
      %v1757 = vpop.permute.xlu0 %1756
      %1758 = vrot.lane.b32.xlu0 %v300, 15
      %v1759 = vpop.permute.xlu0 %1758
      %1760 = vrot.lane.b32.xlu0 %v287, 15
      %v1761 = vpop.permute.xlu0 %1760
      %1762 = vrot.lane.b32.xlu0 %v289, 15
      %v1763 = vpop.permute.xlu0 %1762
      %1764 = vrot.lane.b32.xlu0 %v291, 15
      %v1765 = vpop.permute.xlu0 %1764
      %1766 = vrot.lane.b32.xlu0 %v293, 15
      %v1767 = vpop.permute.xlu0 %1766
      %1768 = vrot.lane.b32.xlu0 %v295, 15
      %v1769 = vpop.permute.xlu0 %1768
      %1770 = vrot.lane.b32.xlu0 %v297, 15
      %v1771 = vpop.permute.xlu0 %1770
      %1772 = vrot.lane.b32.xlu0 %v299, 15
      %v1773 = vpop.permute.xlu0 %1772
      %1774 = vrot.lane.b32.xlu0 %v301, 15
      %v1775 = vpop.permute.xlu0 %1774
      %vm1776 = vcmp.lt.s32.totalorder %v1459, 15
      %v1777 = vsel %vm1776, %v1745, %v1761
      %v1778 = vsel %vm1776, %v1747, %v1763
      %v1779 = vsel %vm1776, %v1749, %v1765
      %v1780 = vsel %vm1776, %v1751, %v1767
      %v1781 = vsel %vm1776, %v1753, %v1769
      %v1782 = vsel %vm1776, %v1755, %v1771
      %v1783 = vsel %vm1776, %v1757, %v1773
      %v1784 = vsel %vm1776, %v1759, %v1775
      %v1785 = vsel %vm1776, %v1761, %v1745
      %v1786 = vsel %vm1776, %v1763, %v1747
      %v1787 = vsel %vm1776, %v1765, %v1749
      %v1788 = vsel %vm1776, %v1767, %v1751
      %v1789 = vsel %vm1776, %v1769, %v1753
      %v1790 = vsel %vm1776, %v1771, %v1755
      %v1791 = vsel %vm1776, %v1773, %v1757
      %v1792 = vsel %vm1776, %v1775, %v1759
      %s1793 = scalar_lea.vmem %s5, 4
      %v1794 = vld [vmem:[%s1793] sm:$0x3]
      %v1796 = vlaneseq
      %v1797 = vshrl.u32 %v1796, 7
      %v1798 = vsub.s32 0, %v1797
      %v1799 = vrot.slane %v1794, %v1798
      %v1800 = vlaneseq
      %v1801 = vshrl.u32 %v1800, 7
      %v1802 = vsub.s32 1, %v1801
      %v1803 = vrot.slane %v1794, %v1802
      %v1806 = vmul.f32 %v1785, %v1799
      %v1807 = vmul.f32 %v1777, %v1803
      %v1808 = vmul.f32 %v1786, %v1799
      %v1809 = vmul.f32 %v1778, %v1803
      %v1810 = vmul.f32 %v1787, %v1799
      %v1811 = vmul.f32 %v1779, %v1803
      %v1812 = vmul.f32 %v1788, %v1799
      %v1813 = vmul.f32 %v1780, %v1803
      %v1814 = vmul.f32 %v1789, %v1799
      %v1815 = vmul.f32 %v1781, %v1803
      %v1816 = vmul.f32 %v1790, %v1799
      %v1817 = vmul.f32 %v1782, %v1803
      %v1818 = vmul.f32 %v1791, %v1799
      %v1819 = vmul.f32 %v1783, %v1803
      %v1820 = vmul.f32 %v1792, %v1799
      %v1821 = vmul.f32 %v1784, %v1803
      %s1822 = scalar_lea.vmem %s3, 128
      %v1823 = vld [vmem:[%s1822] sm:$0xff]
      %v1824 = vld [vmem:[%s1822 + $0x8] sm:$0xff]
      %v1825 = vld [vmem:[%s1822 + $0x10] sm:$0xff]
      %v1826 = vld [vmem:[%s1822 + $0x18] sm:$0xff]
      %v1827 = vld [vmem:[%s1822 + $0x20] sm:$0xff]
      %v1828 = vld [vmem:[%s1822 + $0x28] sm:$0xff]
      %v1829 = vld [vmem:[%s1822 + $0x30] sm:$0xff]
      %v1830 = vld [vmem:[%s1822 + $0x38] sm:$0xff]
      %1832 = vset.pattern.permute.xlu0 0
      %1833 = vperm.xlu0 %1832, %v1823
      %v1834 = vpop.permute.xlu0 %1833
      %1837 = vset.pattern.permute.xlu0 0
      %1838 = vperm.xlu0 %1837, %v1824
      %v1839 = vpop.permute.xlu0 %1838
      %1842 = vset.pattern.permute.xlu0 0
      %1843 = vperm.xlu0 %1842, %v1825
      %v1844 = vpop.permute.xlu0 %1843
      %1847 = vset.pattern.permute.xlu0 0
      %1848 = vperm.xlu0 %1847, %v1826
      %v1849 = vpop.permute.xlu0 %1848
      %1852 = vset.pattern.permute.xlu0 0
      %1853 = vperm.xlu0 %1852, %v1827
      %v1854 = vpop.permute.xlu0 %1853
      %1857 = vset.pattern.permute.xlu0 0
      %1858 = vperm.xlu0 %1857, %v1828
      %v1859 = vpop.permute.xlu0 %1858
      %1862 = vset.pattern.permute.xlu0 0
      %1863 = vperm.xlu0 %1862, %v1829
      %v1864 = vpop.permute.xlu0 %1863
      %1867 = vset.pattern.permute.xlu0 0
      %1868 = vperm.xlu0 %1867, %v1830
      %v1869 = vpop.permute.xlu0 %1868
      %v1871 = vmul.f32 %v1806, %v1834
      %v1872 = vmul.f32 %v1807, %v1834
      %v1873 = vmul.f32 %v1808, %v1839
      %v1874 = vmul.f32 %v1809, %v1839
      %v1875 = vmul.f32 %v1810, %v1844
      %v1876 = vmul.f32 %v1811, %v1844
      %v1877 = vmul.f32 %v1812, %v1849
      %v1878 = vmul.f32 %v1813, %v1849
      %v1879 = vmul.f32 %v1814, %v1854
      %v1880 = vmul.f32 %v1815, %v1854
      %v1881 = vmul.f32 %v1816, %v1859
      %v1882 = vmul.f32 %v1817, %v1859
      %v1883 = vmul.f32 %v1818, %v1864
      %v1884 = vmul.f32 %v1819, %v1864
      %v1885 = vmul.f32 %v1820, %v1869
      %v1886 = vmul.f32 %v1821, %v1869
      %v1887 = vadd.f32 %v1728, %v1871
      %v1888 = vadd.f32 %v1729, %v1872
      %v1889 = vadd.f32 %v1730, %v1873
      %v1890 = vadd.f32 %v1731, %v1874
      %v1891 = vadd.f32 %v1732, %v1875
      %v1892 = vadd.f32 %v1733, %v1876
      %v1893 = vadd.f32 %v1734, %v1877
      %v1894 = vadd.f32 %v1735, %v1878
      %v1895 = vadd.f32 %v1736, %v1879
      %v1896 = vadd.f32 %v1737, %v1880
      %v1897 = vadd.f32 %v1738, %v1881
      %v1898 = vadd.f32 %v1739, %v1882
      %v1899 = vadd.f32 %v1740, %v1883
      %v1900 = vadd.f32 %v1741, %v1884
      %v1901 = vadd.f32 %v1742, %v1885
      %v1902 = vadd.f32 %v1743, %v1886
      %1903 = vrot.lane.b32.xlu0 %v286, 1
      %v1904 = vpop.permute.xlu0 %1903
      %1905 = vrot.lane.b32.xlu0 %v288, 1
      %v1906 = vpop.permute.xlu0 %1905
      %1907 = vrot.lane.b32.xlu0 %v290, 1
      %v1908 = vpop.permute.xlu0 %1907
      %1909 = vrot.lane.b32.xlu0 %v292, 1
      %v1910 = vpop.permute.xlu0 %1909
      %1911 = vrot.lane.b32.xlu0 %v294, 1
      %v1912 = vpop.permute.xlu0 %1911
      %1913 = vrot.lane.b32.xlu0 %v296, 1
      %v1914 = vpop.permute.xlu0 %1913
      %1915 = vrot.lane.b32.xlu0 %v298, 1
      %v1916 = vpop.permute.xlu0 %1915
      %1917 = vrot.lane.b32.xlu0 %v300, 1
      %v1918 = vpop.permute.xlu0 %1917
      %1919 = vrot.lane.b32.xlu0 %v287, 1
      %v1920 = vpop.permute.xlu0 %1919
      %1921 = vrot.lane.b32.xlu0 %v289, 1
      %v1922 = vpop.permute.xlu0 %1921
      %1923 = vrot.lane.b32.xlu0 %v291, 1
      %v1924 = vpop.permute.xlu0 %1923
      %1925 = vrot.lane.b32.xlu0 %v293, 1
      %v1926 = vpop.permute.xlu0 %1925
      %1927 = vrot.lane.b32.xlu0 %v295, 1
      %v1928 = vpop.permute.xlu0 %1927
      %1929 = vrot.lane.b32.xlu0 %v297, 1
      %v1930 = vpop.permute.xlu0 %1929
      %1931 = vrot.lane.b32.xlu0 %v299, 1
      %v1932 = vpop.permute.xlu0 %1931
      %1933 = vrot.lane.b32.xlu0 %v301, 1
      %v1934 = vpop.permute.xlu0 %1933
      %vm1935 = vcmp.lt.s32.totalorder %v1459, 1
      %v1936 = vsel %vm1935, %v1904, %v1920
      %v1937 = vsel %vm1935, %v1906, %v1922
      %v1938 = vsel %vm1935, %v1908, %v1924
      %v1939 = vsel %vm1935, %v1910, %v1926
      %v1940 = vsel %vm1935, %v1912, %v1928
      %v1941 = vsel %vm1935, %v1914, %v1930
      %v1942 = vsel %vm1935, %v1916, %v1932
      %v1943 = vsel %vm1935, %v1918, %v1934
      %v1944 = vsel %vm1935, %v1920, %v1904
      %v1945 = vsel %vm1935, %v1922, %v1906
      %v1946 = vsel %vm1935, %v1924, %v1908
      %v1947 = vsel %vm1935, %v1926, %v1910
      %v1948 = vsel %vm1935, %v1928, %v1912
      %v1949 = vsel %vm1935, %v1930, %v1914
      %v1950 = vsel %vm1935, %v1932, %v1916
      %v1951 = vsel %vm1935, %v1934, %v1918
      %s1952 = scalar_lea.vmem %s5, 6
      %v1953 = vld [vmem:[%s1952] sm:$0x3]
      %v1955 = vlaneseq
      %v1956 = vshrl.u32 %v1955, 7
      %v1957 = vsub.s32 0, %v1956
      %v1958 = vrot.slane %v1953, %v1957
      %v1959 = vlaneseq
      %v1960 = vshrl.u32 %v1959, 7
      %v1961 = vsub.s32 1, %v1960
      %v1962 = vrot.slane %v1953, %v1961
      %v1965 = vmul.f32 %v1944, %v1958
      %v1966 = vmul.f32 %v1936, %v1962
      %v1967 = vmul.f32 %v1945, %v1958
      %v1968 = vmul.f32 %v1937, %v1962
      %v1969 = vmul.f32 %v1946, %v1958
      %v1970 = vmul.f32 %v1938, %v1962
      %v1971 = vmul.f32 %v1947, %v1958
      %v1972 = vmul.f32 %v1939, %v1962
      %v1973 = vmul.f32 %v1948, %v1958
      %v1974 = vmul.f32 %v1940, %v1962
      %v1975 = vmul.f32 %v1949, %v1958
      %v1976 = vmul.f32 %v1941, %v1962
      %v1977 = vmul.f32 %v1950, %v1958
      %v1978 = vmul.f32 %v1942, %v1962
      %v1979 = vmul.f32 %v1951, %v1958
      %v1980 = vmul.f32 %v1943, %v1962
      %s1981 = scalar_lea.vmem %s3, 192
      %v1982 = vld [vmem:[%s1981] sm:$0xff]
      %v1983 = vld [vmem:[%s1981 + $0x8] sm:$0xff]
      %v1984 = vld [vmem:[%s1981 + $0x10] sm:$0xff]
      %v1985 = vld [vmem:[%s1981 + $0x18] sm:$0xff]
      %v1986 = vld [vmem:[%s1981 + $0x20] sm:$0xff]
      %v1987 = vld [vmem:[%s1981 + $0x28] sm:$0xff]
      %v1988 = vld [vmem:[%s1981 + $0x30] sm:$0xff]
      %v1989 = vld [vmem:[%s1981 + $0x38] sm:$0xff]
      %1991 = vset.pattern.permute.xlu0 0
      %1992 = vperm.xlu0 %1991, %v1982
      %v1993 = vpop.permute.xlu0 %1992
      %1996 = vset.pattern.permute.xlu0 0
      %1997 = vperm.xlu0 %1996, %v1983
      %v1998 = vpop.permute.xlu0 %1997
      %2001 = vset.pattern.permute.xlu0 0
      %2002 = vperm.xlu0 %2001, %v1984
      %v2003 = vpop.permute.xlu0 %2002
      %2006 = vset.pattern.permute.xlu0 0
      %2007 = vperm.xlu0 %2006, %v1985
      %v2008 = vpop.permute.xlu0 %2007
      %2011 = vset.pattern.permute.xlu0 0
      %2012 = vperm.xlu0 %2011, %v1986
      %v2013 = vpop.permute.xlu0 %2012
      %2016 = vset.pattern.permute.xlu0 0
      %2017 = vperm.xlu0 %2016, %v1987
      %v2018 = vpop.permute.xlu0 %2017
      %2021 = vset.pattern.permute.xlu0 0
      %2022 = vperm.xlu0 %2021, %v1988
      %v2023 = vpop.permute.xlu0 %2022
      %2026 = vset.pattern.permute.xlu0 0
      %2027 = vperm.xlu0 %2026, %v1989
      %v2028 = vpop.permute.xlu0 %2027
      %v2030 = vmul.f32 %v1965, %v1993
      %v2031 = vmul.f32 %v1966, %v1993
      %v2032 = vmul.f32 %v1967, %v1998
      %v2033 = vmul.f32 %v1968, %v1998
      %v2034 = vmul.f32 %v1969, %v2003
      %v2035 = vmul.f32 %v1970, %v2003
      %v2036 = vmul.f32 %v1971, %v2008
      %v2037 = vmul.f32 %v1972, %v2008
      %v2038 = vmul.f32 %v1973, %v2013
      %v2039 = vmul.f32 %v1974, %v2013
      %v2040 = vmul.f32 %v1975, %v2018
      %v2041 = vmul.f32 %v1976, %v2018
      %v2042 = vmul.f32 %v1977, %v2023
      %v2043 = vmul.f32 %v1978, %v2023
      %v2044 = vmul.f32 %v1979, %v2028
      %v2045 = vmul.f32 %v1980, %v2028
      %v2046 = vadd.f32 %v1887, %v2030
      %v2047 = vadd.f32 %v1888, %v2031
      %v2048 = vadd.f32 %v1889, %v2032
      %v2049 = vadd.f32 %v1890, %v2033
      %v2050 = vadd.f32 %v1891, %v2034
      %v2051 = vadd.f32 %v1892, %v2035
      %v2052 = vadd.f32 %v1893, %v2036
      %v2053 = vadd.f32 %v1894, %v2037
      %v2054 = vadd.f32 %v1895, %v2038
      %v2055 = vadd.f32 %v1896, %v2039
      %v2056 = vadd.f32 %v1897, %v2040
      %v2057 = vadd.f32 %v1898, %v2041
      %v2058 = vadd.f32 %v1899, %v2042
      %v2059 = vadd.f32 %v1900, %v2043
      %v2060 = vadd.f32 %v1901, %v2044
      %v2061 = vadd.f32 %v1902, %v2045
      %2062 = vrot.lane.b32.xlu0 %v286, 127
      %v2063 = vpop.permute.xlu0 %2062
      %2064 = vrot.lane.b32.xlu0 %v288, 127
      %v2065 = vpop.permute.xlu0 %2064
      %2066 = vrot.lane.b32.xlu0 %v290, 127
      %v2067 = vpop.permute.xlu0 %2066
      %2068 = vrot.lane.b32.xlu0 %v292, 127
      %v2069 = vpop.permute.xlu0 %2068
      %2070 = vrot.lane.b32.xlu0 %v294, 127
      %v2071 = vpop.permute.xlu0 %2070
      %2072 = vrot.lane.b32.xlu0 %v296, 127
      %v2073 = vpop.permute.xlu0 %2072
      %2074 = vrot.lane.b32.xlu0 %v298, 127
      %v2075 = vpop.permute.xlu0 %2074
      %2076 = vrot.lane.b32.xlu0 %v300, 127
      %v2077 = vpop.permute.xlu0 %2076
      %2078 = vrot.lane.b32.xlu0 %v287, 127
      %v2079 = vpop.permute.xlu0 %2078
      %2080 = vrot.lane.b32.xlu0 %v289, 127
      %v2081 = vpop.permute.xlu0 %2080
      %2082 = vrot.lane.b32.xlu0 %v291, 127
      %v2083 = vpop.permute.xlu0 %2082
      %2084 = vrot.lane.b32.xlu0 %v293, 127
      %v2085 = vpop.permute.xlu0 %2084
      %2086 = vrot.lane.b32.xlu0 %v295, 127
      %v2087 = vpop.permute.xlu0 %2086
      %2088 = vrot.lane.b32.xlu0 %v297, 127
      %v2089 = vpop.permute.xlu0 %2088
      %2090 = vrot.lane.b32.xlu0 %v299, 127
      %v2091 = vpop.permute.xlu0 %2090
      %2092 = vrot.lane.b32.xlu0 %v301, 127
      %v2093 = vpop.permute.xlu0 %2092
      %vm2094 = vcmp.lt.s32.totalorder %v1459, 127
      %v2095 = vsel %vm2094, %v2063, %v2079
      %v2096 = vsel %vm2094, %v2065, %v2081
      %v2097 = vsel %vm2094, %v2067, %v2083
      %v2098 = vsel %vm2094, %v2069, %v2085
      %v2099 = vsel %vm2094, %v2071, %v2087
      %v2100 = vsel %vm2094, %v2073, %v2089
      %v2101 = vsel %vm2094, %v2075, %v2091
      %v2102 = vsel %vm2094, %v2077, %v2093
      %v2103 = vsel %vm2094, %v2079, %v2063
      %v2104 = vsel %vm2094, %v2081, %v2065
      %v2105 = vsel %vm2094, %v2083, %v2067
      %v2106 = vsel %vm2094, %v2085, %v2069
      %v2107 = vsel %vm2094, %v2087, %v2071
      %v2108 = vsel %vm2094, %v2089, %v2073
      %v2109 = vsel %vm2094, %v2091, %v2075
      %v2110 = vsel %vm2094, %v2093, %v2077
      %s2111 = scalar_lea.vmem %s5, 10
      %v2112 = vld [vmem:[%s2111] sm:$0x3]
      %v2114 = vlaneseq
      %v2115 = vshrl.u32 %v2114, 7
      %v2116 = vsub.s32 0, %v2115
      %v2117 = vrot.slane %v2112, %v2116
      %v2118 = vlaneseq
      %v2119 = vshrl.u32 %v2118, 7
      %v2120 = vsub.s32 1, %v2119
      %v2121 = vrot.slane %v2112, %v2120
      %v2124 = vmul.f32 %v2095, %v2117
      %v2125 = vmul.f32 %v2103, %v2121
      %v2126 = vmul.f32 %v2096, %v2117
      %v2127 = vmul.f32 %v2104, %v2121
      %v2128 = vmul.f32 %v2097, %v2117
      %v2129 = vmul.f32 %v2105, %v2121
      %v2130 = vmul.f32 %v2098, %v2117
      %v2131 = vmul.f32 %v2106, %v2121
      %v2132 = vmul.f32 %v2099, %v2117
      %v2133 = vmul.f32 %v2107, %v2121
      %v2134 = vmul.f32 %v2100, %v2117
      %v2135 = vmul.f32 %v2108, %v2121
      %v2136 = vmul.f32 %v2101, %v2117
      %v2137 = vmul.f32 %v2109, %v2121
      %v2138 = vmul.f32 %v2102, %v2117
      %v2139 = vmul.f32 %v2110, %v2121
      %s2140 = scalar_lea.vmem %s3, 320
      %v2141 = vld [vmem:[%s2140] sm:$0xff]
      %v2142 = vld [vmem:[%s2140 + $0x8] sm:$0xff]
      %v2143 = vld [vmem:[%s2140 + $0x10] sm:$0xff]
      %v2144 = vld [vmem:[%s2140 + $0x18] sm:$0xff]
      %v2145 = vld [vmem:[%s2140 + $0x20] sm:$0xff]
      %v2146 = vld [vmem:[%s2140 + $0x28] sm:$0xff]
      %v2147 = vld [vmem:[%s2140 + $0x30] sm:$0xff]
      %v2148 = vld [vmem:[%s2140 + $0x38] sm:$0xff]
      %2150 = vset.pattern.permute.xlu0 0
      %2151 = vperm.xlu0 %2150, %v2141
      %v2152 = vpop.permute.xlu0 %2151
      %2155 = vset.pattern.permute.xlu0 0
      %2156 = vperm.xlu0 %2155, %v2142
      %v2157 = vpop.permute.xlu0 %2156
      %2160 = vset.pattern.permute.xlu0 0
      %2161 = vperm.xlu0 %2160, %v2143
      %v2162 = vpop.permute.xlu0 %2161
      %2165 = vset.pattern.permute.xlu0 0
      %2166 = vperm.xlu0 %2165, %v2144
      %v2167 = vpop.permute.xlu0 %2166
      %2170 = vset.pattern.permute.xlu0 0
      %2171 = vperm.xlu0 %2170, %v2145
      %v2172 = vpop.permute.xlu0 %2171
      %2175 = vset.pattern.permute.xlu0 0
      %2176 = vperm.xlu0 %2175, %v2146
      %v2177 = vpop.permute.xlu0 %2176
      %2180 = vset.pattern.permute.xlu0 0
      %2181 = vperm.xlu0 %2180, %v2147
      %v2182 = vpop.permute.xlu0 %2181
      %2185 = vset.pattern.permute.xlu0 0
      %2186 = vperm.xlu0 %2185, %v2148
      %v2187 = vpop.permute.xlu0 %2186
      %v2189 = vmul.f32 %v2124, %v2152
      %v2190 = vmul.f32 %v2125, %v2152
      %v2191 = vmul.f32 %v2126, %v2157
      %v2192 = vmul.f32 %v2127, %v2157
      %v2193 = vmul.f32 %v2128, %v2162
      %v2194 = vmul.f32 %v2129, %v2162
      %v2195 = vmul.f32 %v2130, %v2167
      %v2196 = vmul.f32 %v2131, %v2167
      %v2197 = vmul.f32 %v2132, %v2172
      %v2198 = vmul.f32 %v2133, %v2172
      %v2199 = vmul.f32 %v2134, %v2177
      %v2200 = vmul.f32 %v2135, %v2177
      %v2201 = vmul.f32 %v2136, %v2182
      %v2202 = vmul.f32 %v2137, %v2182
      %v2203 = vmul.f32 %v2138, %v2187
      %v2204 = vmul.f32 %v2139, %v2187
      %v2205 = vadd.f32 %v2046, %v2189
      %v2206 = vadd.f32 %v2047, %v2190
      %v2207 = vadd.f32 %v2048, %v2191
      %v2208 = vadd.f32 %v2049, %v2192
      %v2209 = vadd.f32 %v2050, %v2193
      %v2210 = vadd.f32 %v2051, %v2194
      %v2211 = vadd.f32 %v2052, %v2195
      %v2212 = vadd.f32 %v2053, %v2196
      %v2213 = vadd.f32 %v2054, %v2197
      %v2214 = vadd.f32 %v2055, %v2198
      %v2215 = vadd.f32 %v2056, %v2199
      %v2216 = vadd.f32 %v2057, %v2200
      %v2217 = vadd.f32 %v2058, %v2201
      %v2218 = vadd.f32 %v2059, %v2202
      %v2219 = vadd.f32 %v2060, %v2203
      %v2220 = vadd.f32 %v2061, %v2204
      %2221 = vrot.lane.b32.xlu0 %v286, 113
      %v2222 = vpop.permute.xlu0 %2221
      %2223 = vrot.lane.b32.xlu0 %v288, 113
      %v2224 = vpop.permute.xlu0 %2223
      %2225 = vrot.lane.b32.xlu0 %v290, 113
      %v2226 = vpop.permute.xlu0 %2225
      %2227 = vrot.lane.b32.xlu0 %v292, 113
      %v2228 = vpop.permute.xlu0 %2227
      %2229 = vrot.lane.b32.xlu0 %v294, 113
      %v2230 = vpop.permute.xlu0 %2229
      %2231 = vrot.lane.b32.xlu0 %v296, 113
      %v2232 = vpop.permute.xlu0 %2231
      %2233 = vrot.lane.b32.xlu0 %v298, 113
      %v2234 = vpop.permute.xlu0 %2233
      %2235 = vrot.lane.b32.xlu0 %v300, 113
      %v2236 = vpop.permute.xlu0 %2235
      %2237 = vrot.lane.b32.xlu0 %v287, 113
      %v2238 = vpop.permute.xlu0 %2237
      %2239 = vrot.lane.b32.xlu0 %v289, 113
      %v2240 = vpop.permute.xlu0 %2239
      %2241 = vrot.lane.b32.xlu0 %v291, 113
      %v2242 = vpop.permute.xlu0 %2241
      %2243 = vrot.lane.b32.xlu0 %v293, 113
      %v2244 = vpop.permute.xlu0 %2243
      %2245 = vrot.lane.b32.xlu0 %v295, 113
      %v2246 = vpop.permute.xlu0 %2245
      %2247 = vrot.lane.b32.xlu0 %v297, 113
      %v2248 = vpop.permute.xlu0 %2247
      %2249 = vrot.lane.b32.xlu0 %v299, 113
      %v2250 = vpop.permute.xlu0 %2249
      %2251 = vrot.lane.b32.xlu0 %v301, 113
      %v2252 = vpop.permute.xlu0 %2251
      %vm2253 = vcmp.lt.s32.totalorder %v1459, 113
      %v2254 = vsel %vm2253, %v2222, %v2238
      %v2255 = vsel %vm2253, %v2224, %v2240
      %v2256 = vsel %vm2253, %v2226, %v2242
      %v2257 = vsel %vm2253, %v2228, %v2244
      %v2258 = vsel %vm2253, %v2230, %v2246
      %v2259 = vsel %vm2253, %v2232, %v2248
      %v2260 = vsel %vm2253, %v2234, %v2250
      %v2261 = vsel %vm2253, %v2236, %v2252
      %v2262 = vsel %vm2253, %v2238, %v2222
      %v2263 = vsel %vm2253, %v2240, %v2224
      %v2264 = vsel %vm2253, %v2242, %v2226
      %v2265 = vsel %vm2253, %v2244, %v2228
      %v2266 = vsel %vm2253, %v2246, %v2230
      %v2267 = vsel %vm2253, %v2248, %v2232
      %v2268 = vsel %vm2253, %v2250, %v2234
      %v2269 = vsel %vm2253, %v2252, %v2236
      %s2270 = scalar_lea.vmem %s5, 12
      %v2271 = vld [vmem:[%s2270] sm:$0x3]
      %v2273 = vlaneseq
      %v2274 = vshrl.u32 %v2273, 7
      %v2275 = vsub.s32 0, %v2274
      %v2276 = vrot.slane %v2271, %v2275
      %v2277 = vlaneseq
      %v2278 = vshrl.u32 %v2277, 7
      %v2279 = vsub.s32 1, %v2278
      %v2280 = vrot.slane %v2271, %v2279
      %v2283 = vmul.f32 %v2254, %v2276
      %v2284 = vmul.f32 %v2262, %v2280
      %v2285 = vmul.f32 %v2255, %v2276
      %v2286 = vmul.f32 %v2263, %v2280
      %v2287 = vmul.f32 %v2256, %v2276
      %v2288 = vmul.f32 %v2264, %v2280
      %v2289 = vmul.f32 %v2257, %v2276
      %v2290 = vmul.f32 %v2265, %v2280
      %v2291 = vmul.f32 %v2258, %v2276
      %v2292 = vmul.f32 %v2266, %v2280
      %v2293 = vmul.f32 %v2259, %v2276
      %v2294 = vmul.f32 %v2267, %v2280
      %v2295 = vmul.f32 %v2260, %v2276
      %v2296 = vmul.f32 %v2268, %v2280
      %v2297 = vmul.f32 %v2261, %v2276
      %v2298 = vmul.f32 %v2269, %v2280
      %s2299 = scalar_lea.vmem %s3, 384
      %v2300 = vld [vmem:[%s2299] sm:$0xff]
      %v2301 = vld [vmem:[%s2299 + $0x8] sm:$0xff]
      %v2302 = vld [vmem:[%s2299 + $0x10] sm:$0xff]
      %v2303 = vld [vmem:[%s2299 + $0x18] sm:$0xff]
      %v2304 = vld [vmem:[%s2299 + $0x20] sm:$0xff]
      %v2305 = vld [vmem:[%s2299 + $0x28] sm:$0xff]
      %v2306 = vld [vmem:[%s2299 + $0x30] sm:$0xff]
      %v2307 = vld [vmem:[%s2299 + $0x38] sm:$0xff]
      %2309 = vset.pattern.permute.xlu0 0
      %2310 = vperm.xlu0 %2309, %v2300
      %v2311 = vpop.permute.xlu0 %2310
      %2314 = vset.pattern.permute.xlu0 0
      %2315 = vperm.xlu0 %2314, %v2301
      %v2316 = vpop.permute.xlu0 %2315
      %2319 = vset.pattern.permute.xlu0 0
      %2320 = vperm.xlu0 %2319, %v2302
      %v2321 = vpop.permute.xlu0 %2320
      %2324 = vset.pattern.permute.xlu0 0
      %2325 = vperm.xlu0 %2324, %v2303
      %v2326 = vpop.permute.xlu0 %2325
      %2329 = vset.pattern.permute.xlu0 0
      %2330 = vperm.xlu0 %2329, %v2304
      %v2331 = vpop.permute.xlu0 %2330
      %2334 = vset.pattern.permute.xlu0 0
      %2335 = vperm.xlu0 %2334, %v2305
      %v2336 = vpop.permute.xlu0 %2335
      %2339 = vset.pattern.permute.xlu0 0
      %2340 = vperm.xlu0 %2339, %v2306
      %v2341 = vpop.permute.xlu0 %2340
      %2344 = vset.pattern.permute.xlu0 0
      %2345 = vperm.xlu0 %2344, %v2307
      %v2346 = vpop.permute.xlu0 %2345
      %v2348 = vmul.f32 %v2283, %v2311
      %v2349 = vmul.f32 %v2284, %v2311
      %v2350 = vmul.f32 %v2285, %v2316
      %v2351 = vmul.f32 %v2286, %v2316
      %v2352 = vmul.f32 %v2287, %v2321
      %v2353 = vmul.f32 %v2288, %v2321
      %v2354 = vmul.f32 %v2289, %v2326
      %v2355 = vmul.f32 %v2290, %v2326
      %v2356 = vmul.f32 %v2291, %v2331
      %v2357 = vmul.f32 %v2292, %v2331
      %v2358 = vmul.f32 %v2293, %v2336
      %v2359 = vmul.f32 %v2294, %v2336
      %v2360 = vmul.f32 %v2295, %v2341
      %v2361 = vmul.f32 %v2296, %v2341
      %v2362 = vmul.f32 %v2297, %v2346
      %v2363 = vmul.f32 %v2298, %v2346
      %v2364 = vadd.f32 %v2205, %v2348
      %v2365 = vadd.f32 %v2206, %v2349
      %v2366 = vadd.f32 %v2207, %v2350
      %v2367 = vadd.f32 %v2208, %v2351
      %v2368 = vadd.f32 %v2209, %v2352
      %v2369 = vadd.f32 %v2210, %v2353
      %v2370 = vadd.f32 %v2211, %v2354
      %v2371 = vadd.f32 %v2212, %v2355
      %v2372 = vadd.f32 %v2213, %v2356
      %v2373 = vadd.f32 %v2214, %v2357
      %v2374 = vadd.f32 %v2215, %v2358
      %v2375 = vadd.f32 %v2216, %v2359
      %v2376 = vadd.f32 %v2217, %v2360
      %v2377 = vadd.f32 %v2218, %v2361
      %v2378 = vadd.f32 %v2219, %v2362
      %v2379 = vadd.f32 %v2220, %v2363
      %2380 = vrot.lane.b32.xlu0 %v286, 112
      %v2381 = vpop.permute.xlu0 %2380
      %2382 = vrot.lane.b32.xlu0 %v288, 112
      %v2383 = vpop.permute.xlu0 %2382
      %2384 = vrot.lane.b32.xlu0 %v290, 112
      %v2385 = vpop.permute.xlu0 %2384
      %2386 = vrot.lane.b32.xlu0 %v292, 112
      %v2387 = vpop.permute.xlu0 %2386
      %2388 = vrot.lane.b32.xlu0 %v294, 112
      %v2389 = vpop.permute.xlu0 %2388
      %2390 = vrot.lane.b32.xlu0 %v296, 112
      %v2391 = vpop.permute.xlu0 %2390
      %2392 = vrot.lane.b32.xlu0 %v298, 112
      %v2393 = vpop.permute.xlu0 %2392
      %2394 = vrot.lane.b32.xlu0 %v300, 112
      %v2395 = vpop.permute.xlu0 %2394
      %2396 = vrot.lane.b32.xlu0 %v287, 112
      %v2397 = vpop.permute.xlu0 %2396
      %2398 = vrot.lane.b32.xlu0 %v289, 112
      %v2399 = vpop.permute.xlu0 %2398
      %2400 = vrot.lane.b32.xlu0 %v291, 112
      %v2401 = vpop.permute.xlu0 %2400
      %2402 = vrot.lane.b32.xlu0 %v293, 112
      %v2403 = vpop.permute.xlu0 %2402
      %2404 = vrot.lane.b32.xlu0 %v295, 112
      %v2405 = vpop.permute.xlu0 %2404
      %2406 = vrot.lane.b32.xlu0 %v297, 112
      %v2407 = vpop.permute.xlu0 %2406
      %2408 = vrot.lane.b32.xlu0 %v299, 112
      %v2409 = vpop.permute.xlu0 %2408
      %2410 = vrot.lane.b32.xlu0 %v301, 112
      %v2411 = vpop.permute.xlu0 %2410
      %vm2412 = vcmp.lt.s32.totalorder %v1459, 112
      %v2413 = vsel %vm2412, %v2381, %v2397
      %v2414 = vsel %vm2412, %v2383, %v2399
      %v2415 = vsel %vm2412, %v2385, %v2401
      %v2416 = vsel %vm2412, %v2387, %v2403
      %v2417 = vsel %vm2412, %v2389, %v2405
      %v2418 = vsel %vm2412, %v2391, %v2407
      %v2419 = vsel %vm2412, %v2393, %v2409
      %v2420 = vsel %vm2412, %v2395, %v2411
      %v2421 = vsel %vm2412, %v2397, %v2381
      %v2422 = vsel %vm2412, %v2399, %v2383
      %v2423 = vsel %vm2412, %v2401, %v2385
      %v2424 = vsel %vm2412, %v2403, %v2387
      %v2425 = vsel %vm2412, %v2405, %v2389
      %v2426 = vsel %vm2412, %v2407, %v2391
      %v2427 = vsel %vm2412, %v2409, %v2393
      %v2428 = vsel %vm2412, %v2411, %v2395
      %s2429 = scalar_lea.vmem %s5, 14
      %v2430 = vld [vmem:[%s2429] sm:$0x3]
      %v2432 = vlaneseq
      %v2433 = vshrl.u32 %v2432, 7
      %v2434 = vsub.s32 0, %v2433
      %v2435 = vrot.slane %v2430, %v2434
      %v2436 = vlaneseq
      %v2437 = vshrl.u32 %v2436, 7
      %v2438 = vsub.s32 1, %v2437
      %v2439 = vrot.slane %v2430, %v2438
      %v2442 = vmul.f32 %v2413, %v2435
      %v2443 = vmul.f32 %v2421, %v2439
      %v2444 = vmul.f32 %v2414, %v2435
      %v2445 = vmul.f32 %v2422, %v2439
      %v2446 = vmul.f32 %v2415, %v2435
      %v2447 = vmul.f32 %v2423, %v2439
      %v2448 = vmul.f32 %v2416, %v2435
      %v2449 = vmul.f32 %v2424, %v2439
      %v2450 = vmul.f32 %v2417, %v2435
      %v2451 = vmul.f32 %v2425, %v2439
      %v2452 = vmul.f32 %v2418, %v2435
      %v2453 = vmul.f32 %v2426, %v2439
      %v2454 = vmul.f32 %v2419, %v2435
      %v2455 = vmul.f32 %v2427, %v2439
      %v2456 = vmul.f32 %v2420, %v2435
      %v2457 = vmul.f32 %v2428, %v2439
      %s2458 = scalar_lea.vmem %s3, 448
      %v2459 = vld [vmem:[%s2458] sm:$0xff]
      %v2460 = vld [vmem:[%s2458 + $0x8] sm:$0xff]
      %v2461 = vld [vmem:[%s2458 + $0x10] sm:$0xff]
      %v2462 = vld [vmem:[%s2458 + $0x18] sm:$0xff]
      %v2463 = vld [vmem:[%s2458 + $0x20] sm:$0xff]
      %v2464 = vld [vmem:[%s2458 + $0x28] sm:$0xff]
      %v2465 = vld [vmem:[%s2458 + $0x30] sm:$0xff]
      %v2466 = vld [vmem:[%s2458 + $0x38] sm:$0xff]
      %2468 = vset.pattern.permute.xlu0 0
      %2469 = vperm.xlu0 %2468, %v2459
      %v2470 = vpop.permute.xlu0 %2469
      %2473 = vset.pattern.permute.xlu0 0
      %2474 = vperm.xlu0 %2473, %v2460
      %v2475 = vpop.permute.xlu0 %2474
      %2478 = vset.pattern.permute.xlu0 0
      %2479 = vperm.xlu0 %2478, %v2461
      %v2480 = vpop.permute.xlu0 %2479
      %2483 = vset.pattern.permute.xlu0 0
      %2484 = vperm.xlu0 %2483, %v2462
      %v2485 = vpop.permute.xlu0 %2484
      %2488 = vset.pattern.permute.xlu0 0
      %2489 = vperm.xlu0 %2488, %v2463
      %v2490 = vpop.permute.xlu0 %2489
      %2493 = vset.pattern.permute.xlu0 0
      %2494 = vperm.xlu0 %2493, %v2464
      %v2495 = vpop.permute.xlu0 %2494
      %2498 = vset.pattern.permute.xlu0 0
      %2499 = vperm.xlu0 %2498, %v2465
      %v2500 = vpop.permute.xlu0 %2499
      %2503 = vset.pattern.permute.xlu0 0
      %2504 = vperm.xlu0 %2503, %v2466
      %v2505 = vpop.permute.xlu0 %2504
      %v2507 = vmul.f32 %v2442, %v2470
      %v2508 = vmul.f32 %v2443, %v2470
      %v2509 = vmul.f32 %v2444, %v2475
      %v2510 = vmul.f32 %v2445, %v2475
      %v2511 = vmul.f32 %v2446, %v2480
      %v2512 = vmul.f32 %v2447, %v2480
      %v2513 = vmul.f32 %v2448, %v2485
      %v2514 = vmul.f32 %v2449, %v2485
      %v2515 = vmul.f32 %v2450, %v2490
      %v2516 = vmul.f32 %v2451, %v2490
      %v2517 = vmul.f32 %v2452, %v2495
      %v2518 = vmul.f32 %v2453, %v2495
      %v2519 = vmul.f32 %v2454, %v2500
      %v2520 = vmul.f32 %v2455, %v2500
      %v2521 = vmul.f32 %v2456, %v2505
      %v2522 = vmul.f32 %v2457, %v2505
      %v2523 = vadd.f32 %v2364, %v2507
      %v2524 = vadd.f32 %v2365, %v2508
      %v2525 = vadd.f32 %v2366, %v2509
      %v2526 = vadd.f32 %v2367, %v2510
      %v2527 = vadd.f32 %v2368, %v2511
      %v2528 = vadd.f32 %v2369, %v2512
      %v2529 = vadd.f32 %v2370, %v2513
      %v2530 = vadd.f32 %v2371, %v2514
      %v2531 = vadd.f32 %v2372, %v2515
      %v2532 = vadd.f32 %v2373, %v2516
      %v2533 = vadd.f32 %v2374, %v2517
      %v2534 = vadd.f32 %v2375, %v2518
      %v2535 = vadd.f32 %v2376, %v2519
      %v2536 = vadd.f32 %v2377, %v2520
      %v2537 = vadd.f32 %v2378, %v2521
      %v2538 = vadd.f32 %v2379, %v2522
      %2539 = vrot.lane.b32.xlu0 %v286, 111
      %v2540 = vpop.permute.xlu0 %2539
      %2541 = vrot.lane.b32.xlu0 %v288, 111
      %v2542 = vpop.permute.xlu0 %2541
      %2543 = vrot.lane.b32.xlu0 %v290, 111
      %v2544 = vpop.permute.xlu0 %2543
      %2545 = vrot.lane.b32.xlu0 %v292, 111
      %v2546 = vpop.permute.xlu0 %2545
      %2547 = vrot.lane.b32.xlu0 %v294, 111
      %v2548 = vpop.permute.xlu0 %2547
      %2549 = vrot.lane.b32.xlu0 %v296, 111
      %v2550 = vpop.permute.xlu0 %2549
      %2551 = vrot.lane.b32.xlu0 %v298, 111
      %v2552 = vpop.permute.xlu0 %2551
      %2553 = vrot.lane.b32.xlu0 %v300, 111
      %v2554 = vpop.permute.xlu0 %2553
      %2555 = vrot.lane.b32.xlu0 %v287, 111
      %v2556 = vpop.permute.xlu0 %2555
      %2557 = vrot.lane.b32.xlu0 %v289, 111
      %v2558 = vpop.permute.xlu0 %2557
      %2559 = vrot.lane.b32.xlu0 %v291, 111
      %v2560 = vpop.permute.xlu0 %2559
      %2561 = vrot.lane.b32.xlu0 %v293, 111
      %v2562 = vpop.permute.xlu0 %2561
      %2563 = vrot.lane.b32.xlu0 %v295, 111
      %v2564 = vpop.permute.xlu0 %2563
      %2565 = vrot.lane.b32.xlu0 %v297, 111
      %v2566 = vpop.permute.xlu0 %2565
      %2567 = vrot.lane.b32.xlu0 %v299, 111
      %v2568 = vpop.permute.xlu0 %2567
      %2569 = vrot.lane.b32.xlu0 %v301, 111
      %v2570 = vpop.permute.xlu0 %2569
      %vm2571 = vcmp.lt.s32.totalorder %v1459, 111
      %v2572 = vsel %vm2571, %v2540, %v2556
      %v2573 = vsel %vm2571, %v2542, %v2558
      %v2574 = vsel %vm2571, %v2544, %v2560
      %v2575 = vsel %vm2571, %v2546, %v2562
      %v2576 = vsel %vm2571, %v2548, %v2564
      %v2577 = vsel %vm2571, %v2550, %v2566
      %v2578 = vsel %vm2571, %v2552, %v2568
      %v2579 = vsel %vm2571, %v2554, %v2570
      %v2580 = vsel %vm2571, %v2556, %v2540
      %v2581 = vsel %vm2571, %v2558, %v2542
      %v2582 = vsel %vm2571, %v2560, %v2544
      %v2583 = vsel %vm2571, %v2562, %v2546
      %v2584 = vsel %vm2571, %v2564, %v2548
      %v2585 = vsel %vm2571, %v2566, %v2550
      %v2586 = vsel %vm2571, %v2568, %v2552
      %v2587 = vsel %vm2571, %v2570, %v2554
      %s2588 = scalar_lea.vmem %s5, 16
      %v2589 = vld [vmem:[%s2588] sm:$0x3]
      %v2591 = vlaneseq
      %v2592 = vshrl.u32 %v2591, 7
      %v2593 = vsub.s32 0, %v2592
      %v2594 = vrot.slane %v2589, %v2593
      %v2595 = vlaneseq
      %v2596 = vshrl.u32 %v2595, 7
      %v2597 = vsub.s32 1, %v2596
      %v2598 = vrot.slane %v2589, %v2597
      %v2601 = vmul.f32 %v2572, %v2594
      %v2602 = vmul.f32 %v2580, %v2598
      %v2603 = vmul.f32 %v2573, %v2594
      %v2604 = vmul.f32 %v2581, %v2598
      %v2605 = vmul.f32 %v2574, %v2594
      %v2606 = vmul.f32 %v2582, %v2598
      %v2607 = vmul.f32 %v2575, %v2594
      %v2608 = vmul.f32 %v2583, %v2598
      %v2609 = vmul.f32 %v2576, %v2594
      %v2610 = vmul.f32 %v2584, %v2598
      %v2611 = vmul.f32 %v2577, %v2594
      %v2612 = vmul.f32 %v2585, %v2598
      %v2613 = vmul.f32 %v2578, %v2594
      %v2614 = vmul.f32 %v2586, %v2598
      %v2615 = vmul.f32 %v2579, %v2594
      %v2616 = vmul.f32 %v2587, %v2598
      %s2617 = scalar_lea.vmem %s3, 512
      %v2618 = vld [vmem:[%s2617] sm:$0xff]
      %v2619 = vld [vmem:[%s2617 + $0x8] sm:$0xff]
      %v2620 = vld [vmem:[%s2617 + $0x10] sm:$0xff]
      %v2621 = vld [vmem:[%s2617 + $0x18] sm:$0xff]
      %v2622 = vld [vmem:[%s2617 + $0x20] sm:$0xff]
      %v2623 = vld [vmem:[%s2617 + $0x28] sm:$0xff]
      %v2624 = vld [vmem:[%s2617 + $0x30] sm:$0xff]
      %v2625 = vld [vmem:[%s2617 + $0x38] sm:$0xff]
      %2627 = vset.pattern.permute.xlu0 0
      %2628 = vperm.xlu0 %2627, %v2618
      %v2629 = vpop.permute.xlu0 %2628
      %2632 = vset.pattern.permute.xlu0 0
      %2633 = vperm.xlu0 %2632, %v2619
      %v2634 = vpop.permute.xlu0 %2633
      %2637 = vset.pattern.permute.xlu0 0
      %2638 = vperm.xlu0 %2637, %v2620
      %v2639 = vpop.permute.xlu0 %2638
      %2642 = vset.pattern.permute.xlu0 0
      %2643 = vperm.xlu0 %2642, %v2621
      %v2644 = vpop.permute.xlu0 %2643
      %2647 = vset.pattern.permute.xlu0 0
      %2648 = vperm.xlu0 %2647, %v2622
      %v2649 = vpop.permute.xlu0 %2648
      %2652 = vset.pattern.permute.xlu0 0
      %2653 = vperm.xlu0 %2652, %v2623
      %v2654 = vpop.permute.xlu0 %2653
      %2657 = vset.pattern.permute.xlu0 0
      %2658 = vperm.xlu0 %2657, %v2624
      %v2659 = vpop.permute.xlu0 %2658
      %2662 = vset.pattern.permute.xlu0 0
      %2663 = vperm.xlu0 %2662, %v2625
      %v2664 = vpop.permute.xlu0 %2663
      %v2666 = vmul.f32 %v2601, %v2629
      %v2667 = vmul.f32 %v2602, %v2629
      %v2668 = vmul.f32 %v2603, %v2634
      %v2669 = vmul.f32 %v2604, %v2634
      %v2670 = vmul.f32 %v2605, %v2639
      %v2671 = vmul.f32 %v2606, %v2639
      %v2672 = vmul.f32 %v2607, %v2644
      %v2673 = vmul.f32 %v2608, %v2644
      %v2674 = vmul.f32 %v2609, %v2649
      %v2675 = vmul.f32 %v2610, %v2649
      %v2676 = vmul.f32 %v2611, %v2654
      %v2677 = vmul.f32 %v2612, %v2654
      %v2678 = vmul.f32 %v2613, %v2659
      %v2679 = vmul.f32 %v2614, %v2659
      %v2680 = vmul.f32 %v2615, %v2664
      %v2681 = vmul.f32 %v2616, %v2664
      %v2682 = vadd.f32 %v2523, %v2666
      %v2683 = vadd.f32 %v2524, %v2667
      %v2684 = vadd.f32 %v2525, %v2668
      %v2685 = vadd.f32 %v2526, %v2669
      %v2686 = vadd.f32 %v2527, %v2670
      %v2687 = vadd.f32 %v2528, %v2671
      %v2688 = vadd.f32 %v2529, %v2672
      %v2689 = vadd.f32 %v2530, %v2673
      %v2690 = vadd.f32 %v2531, %v2674
      %v2691 = vadd.f32 %v2532, %v2675
      %v2692 = vadd.f32 %v2533, %v2676
      %v2693 = vadd.f32 %v2534, %v2677
      %v2694 = vadd.f32 %v2535, %v2678
      %v2695 = vadd.f32 %v2536, %v2679
      %v2696 = vadd.f32 %v2537, %v2680
      %v2697 = vadd.f32 %v2538, %v2681
      %v2698 = vadd.f32 %v1281, %v2682
      %v2699 = vadd.f32 %v1282, %v2683
      %v2700 = vadd.f32 %v1283, %v2684
      %v2701 = vadd.f32 %v1284, %v2685
      %v2702 = vadd.f32 %v1285, %v2686
      %v2703 = vadd.f32 %v1286, %v2687
      %v2704 = vadd.f32 %v1287, %v2688
      %v2705 = vadd.f32 %v1288, %v2689
      %v2706 = vadd.f32 %v1289, %v2690
      %v2707 = vadd.f32 %v1290, %v2691
      %v2708 = vadd.f32 %v1291, %v2692
      %v2709 = vadd.f32 %v1292, %v2693
      %v2710 = vadd.f32 %v1293, %v2694
      %v2711 = vadd.f32 %v1294, %v2695
      %v2712 = vadd.f32 %v1295, %v2696
      %v2713 = vadd.f32 %v1296, %v2697
      %2714 = vst [vmem:[%s251] sm:$0xff] %v2698
      %2715 = vst [vmem:[%s251 + $0x8] sm:$0xff] %v2699
      %2716 = vst [vmem:[%s251 + $0x10] sm:$0xff] %v2700
      %2717 = vst [vmem:[%s251 + $0x18] sm:$0xff] %v2701
      %2718 = vst [vmem:[%s251 + $0x20] sm:$0xff] %v2702
      %2719 = vst [vmem:[%s251 + $0x28] sm:$0xff] %v2703
      %2720 = vst [vmem:[%s251 + $0x30] sm:$0xff] %v2704
      %2721 = vst [vmem:[%s251 + $0x38] sm:$0xff] %v2705
      %2722 = vst [vmem:[%s251 + $0x40] sm:$0xff] %v2706
      %2723 = vst [vmem:[%s251 + $0x48] sm:$0xff] %v2707
      %2724 = vst [vmem:[%s251 + $0x50] sm:$0xff] %v2708
      %2725 = vst [vmem:[%s251 + $0x58] sm:$0xff] %v2709
      %2726 = vst [vmem:[%s251 + $0x60] sm:$0xff] %v2710
      %2727 = vst [vmem:[%s251 + $0x68] sm:$0xff] %v2711
      %2728 = vst [vmem:[%s251 + $0x70] sm:$0xff] %v2712
      %2729 = vst [vmem:[%s251 + $0x78] sm:$0xff] %v2713
      %p2730 = scmp.lt.s32.totalorder %s17, 1
      %s2731 = scalar_select %p2730, %s17, 1
      %s2732 = smul.addr %s2731, 16
      %s2733 = smul.addr %s2732, 8
      %s2734 = scalar_lea.vmem %s6, %s2733
      // Predicated region
      $region45: #{linear_attention2.1} parent=43 // pred_check
        %p2735 = pneg %p166
      $region46: #{linear_attention2.1} parent=43 // pred_check_branch
        %2737 = sbr.rel (%p2735) target = $region48
      $region47: #{linear_attention2.1} parent=43 // pred_region
        _
      $region48: #{linear_attention2.1} parent=43 // pred_fallthru
        _
    $region44: #{linear_attention2.1} parent=5 // pred_fallthru
      _
    %p2738 = scmp.le.s32.totalorder 2, %s12
    // Predicated region
    $region49: #{linear_attention2.1} parent=5 // pred_check
      %p2739 = pneg %p2738
    $region50: #{linear_attention2.1} parent=5 // pred_check_branch
      %2741 = sbr.rel (%p2739) target = $region52
    $region51: #{linear_attention2.1} parent=5 // pred_region
      %s2742 = ssub.s32 %s12, 2
      // Predicated region
      $region53: #{linear_attention2.1} parent=51 // pred_check
        %p2743 = pneg %p172
      $region54: #{linear_attention2.1} parent=51 // pred_check_branch
        %2745 = sbr.rel (%p2743) target = $region56
      $region55: #{linear_attention2.1} parent=51 // pred_region
        %p2746 = scmp.lt.s32.totalorder %s18, 1
        %s2747 = scalar_select %p2746, %s18, 1
        %s2748 = smul.addr %s2747, 16
        %s2749 = smul.addr %s2748, 8
        %s2750 = scalar_lea.vmem %s6, %s2749
      $region56: #{linear_attention2.1} parent=51 // pred_fallthru
        _
    $region52: #{linear_attention2.1} parent=5 // pred_fallthru
      _
  $region6: #{linear_attention2.1} parent=0 // loop_footer
    %s16 = sadd.s32 1, %s12
  $region7: #{linear_attention2.1} parent=0 // loop_footer_branch
    %11 = sbr.rel target = $region3
  $region8: #{linear_attention2.1} parent=0 // loop_exit
    _

</llo_original>
